<compile_context>
chip_gen: v7x
topology: tpu7x:2x2x1
jax: 0.10.0
libtpu: 0.0.40
codegen_flags: <defaults>
</compile_context>

<pallas_src>
import functools

import jax
import jax.numpy as jnp
from jax.experimental import pallas as pl
from jax.experimental.pallas import tpu as pltpu


LANE = 128
EPS = 1e-5
VMEM_LIMIT = 48 * 1024 * 1024  # <= v7x 64 MiB physical, >> v5e 16 MiB scoped default

RESNET50_CFG = (("layer1", 64, 3, 1), ("layer2", 128, 4, 2),
                ("layer3", 256, 6, 2), ("layer4", 512, 3, 2))
DECODER_SPECS = ((256, 128), (128, 64), (64, 32), (32, 16), (16, 8), (8, 3))


# ----------------------------------------------------------------------------
# small helpers
# ----------------------------------------------------------------------------
def _round_up(x, m):
    return (x + m - 1) // m * m


def _pick_tile(dp):
    """Largest of 512/256/128 that divides dp (dp is a multiple of 128)."""
    for t in (512, 256, 128):
        if dp % t == 0:
            return t
    return dp


def _row_tile(rp, cp):
    """Row tile for the elementwise / BN kernels (~<=2 MiB per f32 input tile)."""
    budget = max(128, (2 * 1024 * 1024) // (4 * cp))
    for t in (1024, 512, 256, 128):
        if t <= budget and rp % t == 0:
            return t
    return rp


def _cparams(sems):
    return pltpu.CompilerParams(dimension_semantics=sems,
                                vmem_limit_bytes=VMEM_LIMIT)


def _conv_out_hw(H, W, k, stride, pad):
    return (H + 2 * pad - k) // stride + 1, (W + 2 * pad - k) // stride + 1


# ----------------------------------------------------------------------------
# Pallas kernels
# ----------------------------------------------------------------------------
def _matmul_kernel(a_ref, b_ref, o_ref, acc_ref):
    @pl.when(pl.program_id(2) == 0)
    def _():
        acc_ref[...] = jnp.zeros_like(acc_ref)

    acc_ref[...] += jnp.dot(a_ref[...], b_ref[...],
                            preferred_element_type=jnp.float32)

    @pl.when(pl.program_id(2) == pl.num_programs(2) - 1)
    def _():
        o_ref[...] = acc_ref[...].astype(o_ref.dtype)


def pallas_matmul(a, w_pad):
    """(M, K) @ (Kp, Np) -> padded (Mp, Np) f32.

    `w_pad` is a pre-padded, pre-transposed bf16 weight; `a` is zero-padded to
    (Mp, Kp) and cast to bf16 here (f32 accumulation on the MXU)."""
    M, K = a.shape
    Kp, Np = w_pad.shape
    Mp = _round_up(M, LANE)
    if (Mp, Kp) != (M, K):
        a = jnp.pad(a, ((0, Mp - M), (0, Kp - K)))
    a = a.astype(jnp.bfloat16)
    tm, tn, tk = _pick_tile(Mp), _pick_tile(Np), _pick_tile(Kp)
    return pl.pallas_call(
        _matmul_kernel,
        out_shape=jax.ShapeDtypeStruct((Mp, Np), jnp.float32),
        grid_spec=pltpu.PrefetchScalarGridSpec(
            num_scalar_prefetch=0,
            grid=(Mp // tm, Np // tn, Kp // tk),
            in_specs=[pl.BlockSpec((tm, tk), lambda i, j, k: (i, k)),
                      pl.BlockSpec((tk, tn), lambda i, j, k: (k, j))],
            out_specs=pl.BlockSpec((tm, tn), lambda i, j, k: (i, j)),
            scratch_shapes=[pltpu.VMEM((tm, tn), jnp.float32)]),
        compiler_params=_cparams(("parallel", "parallel", "arbitrary")),
    )(a, w_pad)


def _bn_stats_kernel(x_ref, s_ref, ss_ref):
    @pl.when(pl.program_id(0) == 0)
    def _():
        s_ref[...] = jnp.zeros_like(s_ref)
        ss_ref[...] = jnp.zeros_like(ss_ref)

    x = x_ref[...]
    s_ref[...] += jnp.sum(x, axis=0, keepdims=True)
    ss_ref[...] += jnp.sum(x * x, axis=0, keepdims=True)


def pallas_bn_stats(x):
    """Row-tiled per-channel sum / sum-of-squares reduction on a (Rp, Cp) slab."""
    Rp, Cp = x.shape
    tr = _row_tile(Rp, Cp)
    return pl.pallas_call(
        _bn_stats_kernel,
        out_shape=(jax.ShapeDtypeStruct((1, Cp), jnp.float32),
                   jax.ShapeDtypeStruct((1, Cp), jnp.float32)),
        grid=(Rp // tr,),
        in_specs=[pl.BlockSpec((tr, Cp), lambda r: (r, 0))],
        out_specs=[pl.BlockSpec((1, Cp), lambda r: (0, 0)),
                   pl.BlockSpec((1, Cp), lambda r: (0, 0))],
        compiler_params=_cparams(("arbitrary",)),
    )(x)


def _affine_act_kernel(x_ref, sc_ref, sh_ref, o_ref, *, act):
    y = x_ref[...] * sc_ref[...] + sh_ref[...]
    if act == "relu":
        y = jnp.maximum(y, 0.0)
    o_ref[...] = y


def _affine_add_relu_kernel(x_ref, sc_ref, sh_ref, r_ref, o_ref):
    y = x_ref[...] * sc_ref[...] + sh_ref[...] + r_ref[...]
    o_ref[...] = jnp.maximum(y, 0.0)


def pallas_affine_act(x, scale, shift, residual=None, *, act):
    """Row-tiled y = x*scale + shift (+residual), optional ReLU."""
    Rp, Cp = x.shape
    tr = _row_tile(Rp, Cp)
    row_spec = pl.BlockSpec((tr, Cp), lambda r: (r, 0))
    vec_spec = pl.BlockSpec((1, Cp), lambda r: (0, 0))
    if residual is None:
        return pl.pallas_call(
            functools.partial(_affine_act_kernel, act=act),
            out_shape=jax.ShapeDtypeStruct((Rp, Cp), jnp.float32),
            grid=(Rp // tr,),
            in_specs=[row_spec, vec_spec, vec_spec],
            out_specs=row_spec,
            compiler_params=_cparams(("parallel",)),
        )(x, scale, shift)
    return pl.pallas_call(
        _affine_add_relu_kernel,
        out_shape=jax.ShapeDtypeStruct((Rp, Cp), jnp.float32),
        grid=(Rp // tr,),
        in_specs=[row_spec, vec_spec, vec_spec, row_spec],
        out_specs=row_spec,
        compiler_params=_cparams(("parallel",)),
    )(x, scale, shift, residual)


def _tanh_kernel(x_ref, o_ref):
    o_ref[...] = jnp.tanh(x_ref[...])


@jax.jit
def pallas_tanh(x):
    Rp, Cp = x.shape
    tr = _row_tile(Rp, Cp)
    spec = pl.BlockSpec((tr, Cp), lambda r: (r, 0))
    return pl.pallas_call(
        _tanh_kernel,
        out_shape=jax.ShapeDtypeStruct((Rp, Cp), jnp.float32),
        grid=(Rp // tr,),
        in_specs=[spec],
        out_specs=spec,
        compiler_params=_cparams(("parallel",)),
    )(x)


# ----------------------------------------------------------------------------
# conv lowering: channel-last im2col (bf16) + Pallas matmul
# ----------------------------------------------------------------------------
def _im2col_nhwc(x, kh, kw, stride, pad):
    """NHWC -> bf16 (N*Ho*Wo, kh*kw*C) patch matrix, (dy, dx) major / channel minor."""
    N, H, W, C = x.shape
    if pad:
        x = jnp.pad(x, ((0, 0), (pad, pad), (pad, pad), (0, 0)))
    Ho, Wo = _conv_out_hw(H, W, kh, stride, pad)
    cols = [x[:, dy:dy + stride * Ho:stride, dx:dx + stride * Wo:stride, :]
            for dy in range(kh) for dx in range(kw)]
    col = jnp.concatenate(cols, axis=-1)
    # TODO(synk): fuse this patch gather into the matmul kernel (shifted loads per
    # K-step) instead of materializing the expanded bf16 slab in HBM.
    return col.reshape(N * Ho * Wo, kh * kw * C).astype(jnp.bfloat16)


@functools.partial(jax.jit, static_argnames=("kh", "kw", "stride", "pad"))
def conv_matmul(x, w_pad, *, kh, kw, stride, pad):
    """Conv2d(no bias) as im2col matmul; 1x1 stride-1 convs skip im2col entirely."""
    if kh == 1 and kw == 1 and stride == 1 and pad == 0:
        N, H, W, C = x.shape
        a = x.reshape(N * H * W, C)
    else:
        a = _im2col_nhwc(x, kh, kw, stride, pad)
    return pallas_matmul(a, w_pad)


dense_matmul = jax.jit(pallas_matmul)


# ----------------------------------------------------------------------------
# BatchNorm (training-mode batch statistics) on padded channel-last slabs
# ----------------------------------------------------------------------------
@functools.partial(jax.jit, static_argnames=("count", "act", "phases"))
def batchnorm(x_pad, gamma, beta, residual=None, *, count, act, phases=1):
    """Two-pass tiled BatchNorm on a zero-padded (Rp, Cp) slab.

    `count` is the TRUE number of elements per channel (padded rows are zero and do
    not perturb the sums).  `phases`>1 folds the sub-pixel phase column-groups of a
    conv-transpose slab into shared per-channel statistics."""
    Rp, Cp = x_pad.shape
    C = gamma.shape[0]
    s, ss = pallas_bn_stats(x_pad)
    s_t = s[:, :phases * C].reshape(phases, C).sum(axis=0, keepdims=True)
    ss_t = ss[:, :phases * C].reshape(phases, C).sum(axis=0, keepdims=True)
    mean = s_t / count
    var = jnp.maximum(ss_t / count - mean * mean, 0.0)
    scale = gamma.reshape(1, C) * jax.lax.rsqrt(var + EPS)
    shift = beta.reshape(1, C) - mean * scale
    if phases > 1:
        scale = jnp.tile(scale, (1, phases))
        shift = jnp.tile(shift, (1, phases))
    pad_c = Cp - scale.shape[1]
    if pad_c:
        # zero scale/shift in padded lanes -> padded channels stay exactly 0
        scale = jnp.pad(scale, ((0, 0), (0, pad_c)))
        shift = jnp.pad(shift, ((0, 0), (0, pad_c)))
    return pallas_affine_act(x_pad, scale, shift, residual, act=act)


def maxpool_nhwc(x, k=3, stride=2, pad=1):
    # TODO(synk): tiny window reduction kept in plain JAX (not a hot path here).
    return jax.lax.reduce_window(
        x, -jnp.inf, jax.lax.max,
        window_dimensions=(1, k, k, 1),
        window_strides=(1, stride, stride, 1),
        padding=((0, 0), (pad, pad), (pad, pad), (0, 0)))


# ----------------------------------------------------------------------------
# Weight packing (done ONCE at init): matmul-ready, 128-padded, bf16
# ----------------------------------------------------------------------------
def _pad_matrix(m):
    K, N = m.shape
    return jnp.pad(m, ((0, _round_up(K, LANE) - K),
                       (0, _round_up(N, LANE) - N))).astype(jnp.bfloat16)


def _pack_conv_weight(w):
    """PyTorch conv weight (Cout, Cin, kh, kw) -> padded bf16 (kh*kw*Cin, Cout)."""
    Cout, Cin, kh, kw = w.shape
    return _pad_matrix(w.transpose(2, 3, 1, 0).reshape(kh * kw * Cin, Cout))


def _pack_deconv_s2_weight(w):
    """ConvTranspose2d(k=4, s=2, p=1) weight (Cin, Cout, 4, 4) -> combined sub-pixel
    conv weight: one 3x3 stride-1 conv producing all 4 output phases, padded bf16
    (9*Cin, 4*Cout).  Phase (ry, rx), window offset (ey, ex): tap k = 3 - r - 2*(e-r)."""
    Cin, Cout, _, _ = w.shape
    wc = jnp.zeros((3, 3, Cin, 2, 2, Cout), jnp.float32)
    for ry in range(2):
        for dy in range(2):
            ky, ey = 3 - ry - 2 * dy, ry + dy
            for rx in range(2):
                for dx in range(2):
                    kx, ex = 3 - rx - 2 * dx, rx + dx
                    wc = wc.at[ey, ex, :, ry, rx, :].set(w[:, :, ky, kx])
    return _pad_matrix(wc.reshape(9 * Cin, 4 * Cout))


# ----------------------------------------------------------------------------
# Parameter initialization (deterministic, synthetic)
# ----------------------------------------------------------------------------
def _bn_params(c):
    return jnp.ones((c,), jnp.float32), jnp.zeros((c,), jnp.float32)


def init_encoder_params(key, out_dim=256):
    keys = iter(jax.random.split(key, 64))
    p = {"conv1_w": _pack_conv_weight(
        jax.random.normal(next(keys), (64, 3, 7, 7), jnp.float32) * 0.05)}
    p["bn1_g"], p["bn1_b"] = _bn_params(64)
    inplanes = 64
    for name, planes, blocks, stride in RESNET50_CFG:
        layer = []
        for b in range(blocks):
            s = stride if b == 0 else 1
            k1, k2, k3, k4 = jax.random.split(next(keys), 4)
            blk = {
                "w1": _pack_conv_weight(
                    jax.random.normal(k1, (planes, inplanes, 1, 1), jnp.float32) * 0.05),
                "w2": _pack_conv_weight(
                    jax.random.normal(k2, (planes, planes, 3, 3), jnp.float32) * 0.05),
                "w3": _pack_conv_weight(
                    jax.random.normal(k3, (planes * 4, planes, 1, 1), jnp.float32) * 0.05),
            }
            blk["g1"], blk["b1"] = _bn_params(planes)
            blk["g2"], blk["b2"] = _bn_params(planes)
            blk["g3"], blk["b3"] = _bn_params(planes * 4)
            if s != 1 or inplanes != planes * 4:
                blk["wds"] = _pack_conv_weight(
                    jax.random.normal(k4, (planes * 4, inplanes, 1, 1), jnp.float32) * 0.05)
                blk["gds"], blk["bds"] = _bn_params(planes * 4)
            layer.append(blk)
            inplanes = planes * 4
        p[name] = layer
    p["fc_w"] = _pad_matrix(
        jax.random.normal(next(keys), (2048, out_dim), jnp.float32) * 0.02)
    p["fc_b"] = jnp.zeros((out_dim,), jnp.float32)
    return p


def init_decoder_params(key):
    # weights_init: Conv* ~ N(0, 0.02); BatchNorm weight ~ N(1, 0.02), bias = 0
    keys = jax.random.split(key, 12)
    cin0, cout0 = DECODER_SPECS[0]
    w0 = jax.random.normal(keys[0], (cin0, cout0, 4, 4), jnp.float32) * 0.02
    # conv0 (1x1 spatial input, stride 1, pad 0): pure matmul weight (Cin, kh*kw*Cout)
    dp = {"w0": _pad_matrix(w0.transpose(0, 2, 3, 1).reshape(cin0, 16 * cout0))}
    for i in range(1, 6):
        cin, cout = DECODER_SPECS[i]
        w = jax.random.normal(keys[i], (cin, cout, 4, 4), jnp.float32) * 0.02
        dp[f"w{i}"] = _pack_deconv_s2_weight(w)
    for i in range(5):
        cout = DECODER_SPECS[i][1]
        dp[f"g{i}"] = 1.0 + 0.02 * jax.random.normal(keys[6 + i], (cout,), jnp.float32)
        dp[f"b{i}"] = jnp.zeros((cout,), jnp.float32)
    return dp


def init_generator_params(key):
    ekey, dkey = jax.random.split(key)
    return {"encoder": init_encoder_params(ekey),
            "decoder": init_decoder_params(dkey)}


# ----------------------------------------------------------------------------
# Forward passes (channel-last / NHWC throughout)
# ----------------------------------------------------------------------------
def bottleneck_forward(p, x, planes, stride):
    N, H, W, Cin = x.shape
    M0 = N * H * W
    cout = planes * 4
    # 1x1 reduce
    o1 = conv_matmul(x, p["w1"], kh=1, kw=1, stride=1, pad=0)
    y1 = batchnorm(o1, p["g1"], p["b1"], count=M0, act="relu")
    x1 = y1[:M0, :planes].reshape(N, H, W, planes)
    # 3x3 (carries the stride)
    Ho, Wo = _conv_out_hw(H, W, 3, stride, 1)
    M1 = N * Ho * Wo
    o2 = conv_matmul(x1, p["w2"], kh=3, kw=3, stride=stride, pad=1)
    y2 = batchnorm(o2, p["g2"], p["b2"], count=M1, act="relu")
    x2 = y2[:M1, :planes].reshape(N, Ho, Wo, planes)
    # 1x1 expand
    o3 = conv_matmul(x2, p["w3"], kh=1, kw=1, stride=1, pad=0)
    # identity / downsample branch (kept as a padded slab with zeros in the padding)
    if "wds" in p:
        oi = conv_matmul(x, p["wds"], kh=1, kw=1, stride=stride, pad=0)
        idp = batchnorm(oi, p["gds"], p["bds"], count=M1, act="none")
    else:
        idp = jnp.pad(x.reshape(M0, Cin),
                      ((0, o3.shape[0] - M0), (0, o3.shape[1] - Cin)))
    y3 = batchnorm(o3, p["g3"], p["b3"], idp, count=M1, act="relu")
    return y3[:M1, :cout].reshape(N, Ho, Wo, cout)


def encoder_forward(ep, x):
    N, H, W, _ = x.shape
    Ho, Wo = _conv_out_hw(H, W, 7, 2, 3)
    o = conv_matmul(x, ep["conv1_w"], kh=7, kw=7, stride=2, pad=3)
    y = batchnorm(o, ep["bn1_g"], ep["bn1_b"], count=N * Ho * Wo, act="relu")
    h = y[:N * Ho * Wo, :64].reshape(N, Ho, Wo, 64)
    h = maxpool_nhwc(h)
    for name, planes, blocks, stride in RESNET50_CFG:
        for b in range(blocks):
            h = bottleneck_forward(ep[name][b], h, planes, stride if b == 0 else 1)
    pooled = jnp.mean(h, axis=(1, 2))                    # adaptive avg-pool -> (N, 2048)
    fco = dense_matmul(pooled, ep["fc_w"])
    return fco[:N, :ep["fc_b"].shape[0]] + ep["fc_b"]


def _pixel_shuffle(y_pad, N, H, W, cout):
    """(N*H*W, 4*cout [padded]) phase slab -> (N, 2H, 2W, cout)."""
    y = y_pad[:N * H * W, :4 * cout].reshape(N, H, W, 2, 2, cout)
    return y.transpose(0, 1, 3, 2, 4, 5).reshape(N, 2 * H, 2 * W, cout)


def decoder_forward(dp, enc):
    N = enc.shape[0]
    cout0 = DECODER_SPECS[0][1]
    # conv0: ConvTranspose2d(256,128,4,1,0) on a 1x1 input == one matmul -> (N,4,4,128)
    o = dense_matmul(enc, dp["w0"])
    slab = o[:N, :16 * cout0].reshape(N * 16, cout0)
    y = batchnorm(slab, dp["g0"], dp["b0"], count=N * 16, act="relu")
    x = y[:N * 16, :cout0].reshape(N, 4, 4, cout0)
    # conv1..conv4: ConvTranspose2d(k=4,s=2,p=1) as combined sub-pixel conv + BN + ReLU
    for i in range(1, 5):
        cout = DECODER_SPECS[i][1]
        Nn, H, W, _ = x.shape
        o = conv_matmul(x, dp[f"w{i}"], kh=3, kw=3, stride=1, pad=1)
        y = batchnorm(o, dp[f"g{i}"], dp[f"b{i}"], count=Nn * 4 * H * W,
                      act="relu", phases=4)
        x = _pixel_shuffle(y, Nn, H, W, cout)
    # conv5 + tanh (tanh on the lane-dense padded slab, shuffle afterwards)
    Nn, H, W, _ = x.shape
    o = conv_matmul(x, dp["w5"], kh=3, kw=3, stride=1, pad=1)
    y = pallas_tanh(o)
    return _pixel_shuffle(y, Nn, H, W, DECODER_SPECS[5][1])


def generator_forward(params, x_nchw):
    x = jnp.transpose(x_nchw, (0, 2, 3, 1))              # NCHW -> NHWC once
    enc = encoder_forward(params["encoder"], x)
    dec = decoder_forward(params["decoder"], enc)
    return jnp.transpose(dec, (0, 3, 1, 2))              # back to NCHW at the boundary


# ----------------------------------------------------------------------------
if __name__ == "__main__":
    key = jax.random.PRNGKey(0)
    pkey, xkey = jax.random.split(key)
    params = init_generator_params(pkey)
    x = jax.random.normal(xkey, (2, 3, 64, 64), jnp.float32)   # NCHW images
    out = generator_forward(params, x)
    out = jax.block_until_ready(out)
    assert out.shape == (2, 3, 128, 128), out.shape
    assert bool(jnp.all(jnp.isfinite(out)))
    print("KERNEL_OK")
</pallas_src>

<mosaic_0001>
module attributes {stable_mosaic.version = 11 : i64} {
  func.func @_matmul_kernel(%arg0: i32, %arg1: i32, %arg2: i32, %arg3: memref<512x256xbf16, #tpu.memory_space<vmem>>, %arg4: memref<256x128xbf16, #tpu.memory_space<vmem>>, %arg5: memref<512x128xf32, #tpu.memory_space<vmem>>, %arg6: memref<512x128xf32, #tpu.memory_space<vmem>>) attributes {dimension_semantics = [#tpu.dimension_semantics<parallel>, #tpu.dimension_semantics<parallel>, #tpu.dimension_semantics<arbitrary>], iteration_bounds = array<i64: 4, 1, 1>, scalar_prefetch = 0 : i64, scratch_operands = 1 : i64, tpu.core_type = #tpu.core_type<tc>, window_params = [{transform_indices = @transform_0, window_bounds = array<i64: 512, 256>}, {transform_indices = @transform_1, window_bounds = array<i64: 256, 128>}, {transform_indices = @transform_2, window_bounds = array<i64: 512, 128>}]} {
    %c0_i32 = arith.constant 0 : i32
    %0 = arith.cmpi eq, %arg2, %c0_i32 : i32
    %1 = arith.extui %0 : i1 to i32
    %c0_i32_0 = arith.constant 0 : i32
    %2 = arith.cmpi ne, %1, %c0_i32_0 : i32
    scf.if %2 {
      %cst_10 = arith.constant 0.000000e+00 : f32
      %12 = vector.broadcast %cst_10 : f32 to vector<512x128xf32>
      %c0_11 = arith.constant 0 : index
      %c0_12 = arith.constant 0 : index
      %13 = vector.load %arg6[%c0_11, %c0_12] : memref<512x128xf32, #tpu.memory_space<vmem>>, vector<512x128xf32>
      tpu.vector_store %arg6[%c0_11, %c0_12], %12 {strides = array<i32>} : memref<512x128xf32, #tpu.memory_space<vmem>>, vector<512x128xf32>,
    } else {
    }
    %c0 = arith.constant 0 : index
    %c0_1 = arith.constant 0 : index
    %3 = vector.load %arg6[%c0, %c0_1] : memref<512x128xf32, #tpu.memory_space<vmem>>, vector<512x128xf32>
    %c0_2 = arith.constant 0 : index
    %c0_3 = arith.constant 0 : index
    %4 = vector.load %arg3[%c0_2, %c0_3] : memref<512x256xbf16, #tpu.memory_space<vmem>>, vector<512x256xbf16>
    %c0_4 = arith.constant 0 : index
    %c0_5 = arith.constant 0 : index
    %5 = vector.load %arg4[%c0_4, %c0_5] : memref<256x128xbf16, #tpu.memory_space<vmem>>, vector<256x128xbf16>
    %cst = arith.constant dense<0.000000e+00> : vector<512x128xf32>
    %6 = tpu.matmul %4, %5, %cst {dimension_numbers = #tpu.dot_dimension_numbers<[1], [0], [0], [1], [0, 0, 1, 1], [], []>} : vector<512x256xbf16>, vector<256x128xbf16>, vector<512x128xf32> -> vector<512x128xf32>
    %7 = arith.addf %3, %6 : vector<512x128xf32>
    %c0_6 = arith.constant 0 : index
    %c0_7 = arith.constant 0 : index
    %8 = vector.load %arg6[%c0_6, %c0_7] : memref<512x128xf32, #tpu.memory_space<vmem>>, vector<512x128xf32>
    tpu.vector_store %arg6[%c0_6, %c0_7], %7 {strides = array<i32>} : memref<512x128xf32, #tpu.memory_space<vmem>>, vector<512x128xf32>,
    %c0_i32_8 = arith.constant 0 : i32
    %9 = arith.cmpi eq, %arg2, %c0_i32_8 : i32
    %10 = arith.extui %9 : i1 to i32
    %c0_i32_9 = arith.constant 0 : i32
    %11 = arith.cmpi ne, %10, %c0_i32_9 : i32
    scf.if %11 {
      %c0_10 = arith.constant 0 : index
      %c0_11 = arith.constant 0 : index
      %12 = vector.load %arg6[%c0_10, %c0_11] : memref<512x128xf32, #tpu.memory_space<vmem>>, vector<512x128xf32>
      %c0_12 = arith.constant 0 : index
      %c0_13 = arith.constant 0 : index
      %13 = vector.load %arg5[%c0_12, %c0_13] : memref<512x128xf32, #tpu.memory_space<vmem>>, vector<512x128xf32>
      tpu.vector_store %arg5[%c0_12, %c0_13], %12 {strides = array<i32>} : memref<512x128xf32, #tpu.memory_space<vmem>>, vector<512x128xf32>,
    } else {
    }
    return
  }
  func.func @transform_0(%arg0: i32, %arg1: i32, %arg2: i32) -> (i32, i32) {
    %c0_i32 = arith.constant 0 : i32
    return %arg0, %arg2 : i32, i32
  }
  func.func @transform_1(%arg0: i32, %arg1: i32, %arg2: i32) -> (i32, i32) {
    %c0_i32 = arith.constant 0 : i32
    return %arg2, %arg1 : i32, i32
  }
  func.func @transform_2(%arg0: i32, %arg1: i32, %arg2: i32) -> (i32, i32) {
    %c0_i32 = arith.constant 0 : i32
    return %arg0, %arg1 : i32, i32
  }
}

</mosaic_0001>

<llo_original>
// kernel: conv_matmul.1
$region0: #{conv_matmul.1}
  #allocation0 [shape = 'u32[]', space=smem, size = 0x4, offset = 0x4, fixed_abs, tag = 'smem constant byte address 0x4 - core index']
  #allocation1 [shape = 'u32[144,128]{1,0:T(1,128)}', space=vmem, size = 0x12000, scoped, tag = 'internal scratch']
  #allocation2 [shape = 'f32[512,128]{1,0:T(8,128)}', space=vmem, size = 0x40000, scoped, tag = 'scratch operand']
  %s0 = inlined_call_operand.vmem [shape: bf16[2048,256], index: 0, kind: input, shape index: {}]
  %s1 = inlined_call_operand.vmem [shape: bf16[256,128], index: 1, kind: input, shape index: {}]
  %s2 = inlined_call_operand.hbm [shape: f32[2048,128], index: 2, kind: output, shape index: {}]
  %s3 = sld [smem:[#allocation0]]
  $region49: #{conv_matmul.1} parent=0
    _
  %s5 = ssub.s32 1, %s3
  %s6 = scalar_select 0, %s5, %s3
  $region1: #{conv_matmul.1} parent=0
    #allocation3 [shape = 'u8[524288]{0}', space=vmem, size = 0x80000, scoped, tag = 'output window, operand 0']
    #allocation4 [shape = 's32[2]{0}', space=sflag, size = 0x8, scoped, tag = 'scoped memory for conv_matmul.1']
    %7 = vsyncpa [#allocation4], 0
    %s8 = scalar_lea.sflag [#allocation4], 1
    %9 = vsyncpa %s8, 0
    loop: start=0, step=1, limit=6
    $region2: #{conv_matmul.1} parent=1 // loop_pre_header
      _
    $region3: #{conv_matmul.1} parent=1 // loop_header
      %s11 = sphi 0, %s15
      %p12 = scmp.ge.s32.totalorder %s11, 6
      %s18 = sphi 0, %s37
      %s19 = sphi 0, %s33
      %s20 = sphi 0, %s29
      %s21 = sphi 0, %s18
      %s22 = sphi 0, %s19
      %s23 = sphi 0, %s20
      %s24 = sphi 0, %s21
      %s25 = sphi 0, %s22
      %s26 = sphi 0, %s23
      %s42 = sphi 0, %s44
      %s45 = sphi 0, %s42
      %s46 = sphi 0, %s45
      %s62 = sphi 0, %s46
      %s70 = sphi 0, %s72
      %s73 = sphi 0, %s70
      %s74 = sphi 0, %s73
      %s90 = sphi 0, %s74
      %s98 = sphi 0, %s100
      %s101 = sphi 0, %s98
      %s102 = sphi 0, %s101
      %s118 = sphi 0, %s102
    $region4: #{conv_matmul.1} parent=1 // loop_header_branch
      %14 = sbr.rel (%p12) target = $region8
    $region5: #{conv_matmul.1} parent=1 // loop_body
      %s16 = ssub.s32 %s11, 1
      %s17 = ssub.s32 %s11, 2
      %s27 = sadd.s32 1, %s20
      %p28 = scmp.ge.s32.totalorder %s27, 1
      %s29 = scalar_select %p28, 0, %s27
      %s30 = sadd.s32 1, %s19
      %s31 = scalar_select %p28, %s30, %s19
      %p32 = scmp.ge.s32.totalorder %s31, 1
      %s33 = scalar_select %p32, 0, %s31
      %s34 = sadd.s32 1, %s18
      %s35 = scalar_select %p32, %s34, %s18
      %p36 = scmp.ge.s32.totalorder %s35, 4
      %s37 = scalar_select %p36, 0, %s35
      %s38 = ssub.s32 %s18, %s37
      %s39 = ssub.s32 %s20, %s29
      %s40 = sor.u32 %s38, %s39
      %p41 = scmp.eq.s32.totalorder %s40, 0
      %s43 = sadd.s32 %s42, 1
      %s44 = scalar_select %p41, %s42, %s43
      %p47 = pneg %p41
      %p48 = scmp.eq.s32.totalorder %s11, 3
      %p49 = por %p47, %p48
      %p50 = scmp.ne.s32.totalorder %s42, %s45
      %p51 = scmp.eq.s32.totalorder %s11, 0
      %p52 = por %p50, %p51
      %p53 = scmp.ne.s32.totalorder %s42, %s45
      %p54 = scmp.eq.s32.totalorder %s16, 3
      %p55 = por %p53, %p54
      %p56 = scmp.ne.s32.totalorder %s45, %s46
      %p57 = scmp.eq.s32.totalorder %s16, 0
      %p58 = por %p56, %p57
      %p59 = scmp.ne.s32.totalorder %s45, %s46
      %p60 = scmp.eq.s32.totalorder %s17, 3
      %p61 = por %p59, %p60
      %p63 = scmp.ne.s32.totalorder %s46, %s62
      %p64 = scmp.eq.s32.totalorder %s17, 0
      %p65 = por %p63, %p64
      %s66 = ssub.s32 %s20, %s29
      %s67 = ssub.s32 %s19, %s33
      %s68 = sor.u32 %s66, %s67
      %p69 = scmp.eq.s32.totalorder %s68, 0
      %s71 = sadd.s32 %s70, 1
      %s72 = scalar_select %p69, %s70, %s71
      %p75 = pneg %p69
      %p76 = scmp.eq.s32.totalorder %s11, 3
      %p77 = por %p75, %p76
      %p78 = scmp.ne.s32.totalorder %s70, %s73
      %p79 = scmp.eq.s32.totalorder %s11, 0
      %p80 = por %p78, %p79
      %p81 = scmp.ne.s32.totalorder %s70, %s73
      %p82 = scmp.eq.s32.totalorder %s16, 3
      %p83 = por %p81, %p82
      %p84 = scmp.ne.s32.totalorder %s73, %s74
      %p85 = scmp.eq.s32.totalorder %s16, 0
      %p86 = por %p84, %p85
      %p87 = scmp.ne.s32.totalorder %s73, %s74
      %p88 = scmp.eq.s32.totalorder %s17, 3
      %p89 = por %p87, %p88
      %p91 = scmp.ne.s32.totalorder %s74, %s90
      %p92 = scmp.eq.s32.totalorder %s17, 0
      %p93 = por %p91, %p92
      %s94 = ssub.s32 %s18, %s37
      %s95 = ssub.s32 %s19, %s33
      %s96 = sor.u32 %s94, %s95
      %p97 = scmp.eq.s32.totalorder %s96, 0
      %s99 = sadd.s32 %s98, 1
      %s100 = scalar_select %p97, %s98, %s99
      %p103 = pneg %p97
      %p104 = scmp.eq.s32.totalorder %s11, 3
      %p105 = por %p103, %p104
      %p106 = scmp.ne.s32.totalorder %s98, %s101
      %p107 = scmp.eq.s32.totalorder %s11, 0
      %p108 = por %p106, %p107
      %p109 = scmp.ne.s32.totalorder %s98, %s101
      %p110 = scmp.eq.s32.totalorder %s16, 3
      %p111 = por %p109, %p110
      %p112 = scmp.ne.s32.totalorder %s101, %s102
      %p113 = scmp.eq.s32.totalorder %s16, 0
      %p114 = por %p112, %p113
      %p115 = scmp.ne.s32.totalorder %s101, %s102
      %p116 = scmp.eq.s32.totalorder %s17, 3
      %p117 = por %p115, %p116
      %p119 = scmp.ne.s32.totalorder %s102, %s118
      %p120 = scmp.eq.s32.totalorder %s17, 0
      %p121 = por %p119, %p120
      %p122 = scmp.le.s32.totalorder 1, %s11
      %p123 = scmp.lt.s32.totalorder %s11, 5
      %p124 = pnand %p122, %p123
      %p125 = pneg %p124
      // Predicated region
      $region9: #{conv_matmul.1} parent=5 // pred_check
        _
      $region10: #{conv_matmul.1} parent=5 // pred_check_branch
        %127 = sbr.rel (%p124) target = $region12
      $region11: #{conv_matmul.1} parent=5 // pred_region
        %s128 = ssub.s32 %s11, 1
        // Predicated region
        $region13: #{conv_matmul.1} parent=11 // pred_check
          %p129 = pneg %p86
        $region14: #{conv_matmul.1} parent=11 // pred_check_branch
          %131 = sbr.rel (%p129) target = $region16
        $region15: #{conv_matmul.1} parent=11 // pred_region
          %s132 = smul.u32 32, %s23
          %p133 = scmp.lt.s32.totalorder %s132, 31
          %s134 = scalar_select %p133, %s132, 31
          %p135 = scmp.lt.s32.totalorder %s22, 0
          %s136 = scalar_select %p135, %s22, 0
          %s137 = sadd.s32 %s136, %s134
          %s138 = smul.addr %s137, 4
          %s139 = scalar_lea.vmem %s1, %s138
          %s140 = smul.u32 32, %s23
        $region16: #{conv_matmul.1} parent=11 // pred_fallthru
          _
      $region12: #{conv_matmul.1} parent=5 // pred_fallthru
        _
      %p141 = scmp.lt.s32.totalorder %s11, 4
      // Predicated region
      $region17: #{conv_matmul.1} parent=5 // pred_check
        %p142 = pneg %p141
      $region18: #{conv_matmul.1} parent=5 // pred_check_branch
        %144 = sbr.rel (%p142) target = $region20
      $region19: #{conv_matmul.1} parent=5 // pred_region
        // Predicated region
        $region21: #{conv_matmul.1} parent=19 // pred_check
          %p145 = pneg %p52
        $region22: #{conv_matmul.1} parent=19 // pred_check_branch
          %147 = sbr.rel (%p145) target = $region24
        $region23: #{conv_matmul.1} parent=19 // pred_region
          %s148 = smul.u32 64, %s18
          %s149 = smul.u32 2, %s20
          %p150 = scmp.lt.s32.totalorder %s148, 255
          %s151 = scalar_select %p150, %s148, 255
          %p152 = scmp.lt.s32.totalorder %s149, 1
          %s153 = scalar_select %p152, %s149, 1
          %s154 = smul.addr %s151, 2
          %s155 = sadd.s32 %s153, %s154
          %s156 = smul.addr %s155, 4
          %s157 = scalar_lea.vmem %s0, %s156
          %s158 = smul.u32 64, %s18
          %s159 = smul.u32 2, %s20
        $region24: #{conv_matmul.1} parent=19 // pred_fallthru
          _
      $region20: #{conv_matmul.1} parent=5 // pred_fallthru
        _
      %p160 = scmp.le.s32.totalorder 1, %s11
      %p161 = scmp.lt.s32.totalorder %s11, 5
      %p162 = pnand %p160, %p161
      %p163 = pneg %p162
      // Predicated region
      $region25: #{conv_matmul.1} parent=5 // pred_check
        _
      $region26: #{conv_matmul.1} parent=5 // pred_check_branch
        %165 = sbr.rel (%p162) target = $region28
      $region27: #{conv_matmul.1} parent=5 // pred_region
        %s166 = ssub.s32 %s11, 1
        %s167 = smul.u32 64, %s21
        %s168 = smul.u32 2, %s23
        %p169 = scmp.lt.s32.totalorder %s167, 255
        %s170 = scalar_select %p169, %s167, 255
        %p171 = scmp.lt.s32.totalorder %s168, 1
        %s172 = scalar_select %p171, %s168, 1
        %s173 = smul.addr %s170, 2
        %s174 = sadd.s32 %s172, %s173
        %s175 = smul.addr %s174, 4
        %s176 = scalar_lea.vmem %s0, %s175
        %p177 = pneg %p58
        %p178 = pneg %p55
        %s179 = smul.u32 32, %s23
        %p180 = scmp.lt.s32.totalorder %s179, 31
        %s181 = scalar_select %p180, %s179, 31
        %p182 = scmp.lt.s32.totalorder %s22, 0
        %s183 = scalar_select %p182, %s22, 0
        %s184 = sadd.s32 %s183, %s181
        %s185 = smul.addr %s184, 4
        %s186 = scalar_lea.vmem %s1, %s185
        %p187 = pneg %p86
        %p188 = pneg %p83
        %p189 = pneg %p114
        %p190 = pneg %p111
        %s191 = sand.u32 %s101, 1
        %s192 = scalar_lea.sflag [#allocation4], %s191
        %s193 = sand.u32 %s101, 1
        %s194 = smul.addr %s193, 512
        %s195 = scalar_lea.vmem [#allocation3], %s194
        %s196 = smul.u32 64, %s21
        %s197 = smul.u32 2, %s23
        %p198 = scmp.lt.s32.totalorder %s196, 255
        %s199 = scalar_select %p198, %s196, 255
        %p200 = scmp.lt.s32.totalorder %s197, 1
        %s201 = scalar_select %p200, %s197, 1
        %s202 = smul.addr %s199, 2
        %s203 = sadd.s32 %s201, %s202
        %s204 = smul.addr %s203, 4
        %s205 = scalar_lea.vmem %s0, %s204
        %s206 = smul.u32 64, %s21
        %s207 = smul.u32 2, %s23
        %s208 = smul.u32 32, %s23
        %p209 = scmp.lt.s32.totalorder %s208, 31
        %s210 = scalar_select %p209, %s208, 31
        %p211 = scmp.lt.s32.totalorder %s22, 0
        %s212 = scalar_select %p211, %s22, 0
        %s213 = sadd.s32 %s212, %s210
        %s214 = smul.addr %s213, 4
        %s215 = scalar_lea.vmem %s1, %s214
        %s216 = smul.u32 32, %s23
        %s217 = smul.u32 64, %s21
        %p219 = scmp.eq.s32.totalorder %s23, 0
        // Predicated region
        $region29: #{conv_matmul.1} parent=27 // pred_check
          %p220 = pneg %p219
        $region30: #{conv_matmul.1} parent=27 // pred_check_branch
          %222 = sbr.rel (%p220) target = $region32
        $region31: #{conv_matmul.1} parent=27 // pred_region
          %223 = vst [vmem:[#allocation2] sm:$0xff] 0.0
          %224 = vst [vmem:[#allocation2 + $0x8] sm:$0xff] 0.0
          %225 = vst [vmem:[#allocation2 + $0x10] sm:$0xff] 0.0
          %226 = vst [vmem:[#allocation2 + $0x18] sm:$0xff] 0.0
          %227 = vst [vmem:[#allocation2 + $0x20] sm:$0xff] 0.0
          %228 = vst [vmem:[#allocation2 + $0x28] sm:$0xff] 0.0
          %229 = vst [vmem:[#allocation2 + $0x30] sm:$0xff] 0.0
          %230 = vst [vmem:[#allocation2 + $0x38] sm:$0xff] 0.0
          %231 = vst [vmem:[#allocation2 + $0x40] sm:$0xff] 0.0
          %232 = vst [vmem:[#allocation2 + $0x48] sm:$0xff] 0.0
          %233 = vst [vmem:[#allocation2 + $0x50] sm:$0xff] 0.0
          %234 = vst [vmem:[#allocation2 + $0x58] sm:$0xff] 0.0
          %235 = vst [vmem:[#allocation2 + $0x60] sm:$0xff] 0.0
          %236 = vst [vmem:[#allocation2 + $0x68] sm:$0xff] 0.0
          %237 = vst [vmem:[#allocation2 + $0x70] sm:$0xff] 0.0
          %238 = vst [vmem:[#allocation2 + $0x78] sm:$0xff] 0.0
          %239 = vst [vmem:[#allocation2 + $0x80] sm:$0xff] 0.0
          %240 = vst [vmem:[#allocation2 + $0x88] sm:$0xff] 0.0
          %241 = vst [vmem:[#allocation2 + $0x90] sm:$0xff] 0.0
          %242 = vst [vmem:[#allocation2 + $0x98] sm:$0xff] 0.0
          %243 = vst [vmem:[#allocation2 + $0xa0] sm:$0xff] 0.0
          %244 = vst [vmem:[#allocation2 + $0xa8] sm:$0xff] 0.0
          %245 = vst [vmem:[#allocation2 + $0xb0] sm:$0xff] 0.0
          %246 = vst [vmem:[#allocation2 + $0xb8] sm:$0xff] 0.0
          %247 = vst [vmem:[#allocation2 + $0xc0] sm:$0xff] 0.0
          %248 = vst [vmem:[#allocation2 + $0xc8] sm:$0xff] 0.0
          %249 = vst [vmem:[#allocation2 + $0xd0] sm:$0xff] 0.0
          %250 = vst [vmem:[#allocation2 + $0xd8] sm:$0xff] 0.0
          %251 = vst [vmem:[#allocation2 + $0xe0] sm:$0xff] 0.0
          %252 = vst [vmem:[#allocation2 + $0xe8] sm:$0xff] 0.0
          %253 = vst [vmem:[#allocation2 + $0xf0] sm:$0xff] 0.0
          %254 = vst [vmem:[#allocation2 + $0xf8] sm:$0xff] 0.0
          %255 = vst [vmem:[#allocation2 + $0x100] sm:$0xff] 0.0
          %256 = vst [vmem:[#allocation2 + $0x108] sm:$0xff] 0.0
          %257 = vst [vmem:[#allocation2 + $0x110] sm:$0xff] 0.0
          %258 = vst [vmem:[#allocation2 + $0x118] sm:$0xff] 0.0
          %259 = vst [vmem:[#allocation2 + $0x120] sm:$0xff] 0.0
          %260 = vst [vmem:[#allocation2 + $0x128] sm:$0xff] 0.0
          %261 = vst [vmem:[#allocation2 + $0x130] sm:$0xff] 0.0
          %262 = vst [vmem:[#allocation2 + $0x138] sm:$0xff] 0.0
          %263 = vst [vmem:[#allocation2 + $0x140] sm:$0xff] 0.0
          %264 = vst [vmem:[#allocation2 + $0x148] sm:$0xff] 0.0
          %265 = vst [vmem:[#allocation2 + $0x150] sm:$0xff] 0.0
          %266 = vst [vmem:[#allocation2 + $0x158] sm:$0xff] 0.0
          %267 = vst [vmem:[#allocation2 + $0x160] sm:$0xff] 0.0
          %268 = vst [vmem:[#allocation2 + $0x168] sm:$0xff] 0.0
          %269 = vst [vmem:[#allocation2 + $0x170] sm:$0xff] 0.0
          %270 = vst [vmem:[#allocation2 + $0x178] sm:$0xff] 0.0
          %271 = vst [vmem:[#allocation2 + $0x180] sm:$0xff] 0.0
          %272 = vst [vmem:[#allocation2 + $0x188] sm:$0xff] 0.0
          %273 = vst [vmem:[#allocation2 + $0x190] sm:$0xff] 0.0
          %274 = vst [vmem:[#allocation2 + $0x198] sm:$0xff] 0.0
          %275 = vst [vmem:[#allocation2 + $0x1a0] sm:$0xff] 0.0
          %276 = vst [vmem:[#allocation2 + $0x1a8] sm:$0xff] 0.0
          %277 = vst [vmem:[#allocation2 + $0x1b0] sm:$0xff] 0.0
          %278 = vst [vmem:[#allocation2 + $0x1b8] sm:$0xff] 0.0
          %279 = vst [vmem:[#allocation2 + $0x1c0] sm:$0xff] 0.0
          %280 = vst [vmem:[#allocation2 + $0x1c8] sm:$0xff] 0.0
          %281 = vst [vmem:[#allocation2 + $0x1d0] sm:$0xff] 0.0
          %282 = vst [vmem:[#allocation2 + $0x1d8] sm:$0xff] 0.0
          %283 = vst [vmem:[#allocation2 + $0x1e0] sm:$0xff] 0.0
          %284 = vst [vmem:[#allocation2 + $0x1e8] sm:$0xff] 0.0
          %285 = vst [vmem:[#allocation2 + $0x1f0] sm:$0xff] 0.0
          %286 = vst [vmem:[#allocation2 + $0x1f8] sm:$0xff] 0.0
        $region32: #{conv_matmul.1} parent=27 // pred_fallthru
          _
        %v287 = vld [vmem:[#allocation2] sm:$0xff]
        %v288 = vld [vmem:[#allocation2 + $0x8] sm:$0xff]
        %v289 = vld [vmem:[#allocation2 + $0x10] sm:$0xff]
        %v290 = vld [vmem:[#allocation2 + $0x18] sm:$0xff]
        %v291 = vld [vmem:[#allocation2 + $0x20] sm:$0xff]
        %v292 = vld [vmem:[#allocation2 + $0x28] sm:$0xff]
        %v293 = vld [vmem:[#allocation2 + $0x30] sm:$0xff]
        %v294 = vld [vmem:[#allocation2 + $0x38] sm:$0xff]
        %v295 = vld [vmem:[#allocation2 + $0x40] sm:$0xff]
        %v296 = vld [vmem:[#allocation2 + $0x48] sm:$0xff]
        %v297 = vld [vmem:[#allocation2 + $0x50] sm:$0xff]
        %v298 = vld [vmem:[#allocation2 + $0x58] sm:$0xff]
        %v299 = vld [vmem:[#allocation2 + $0x60] sm:$0xff]
        %v300 = vld [vmem:[#allocation2 + $0x68] sm:$0xff]
        %v301 = vld [vmem:[#allocation2 + $0x70] sm:$0xff]
        %v302 = vld [vmem:[#allocation2 + $0x78] sm:$0xff]
        %v303 = vld [vmem:[#allocation2 + $0x80] sm:$0xff]
        %v304 = vld [vmem:[#allocation2 + $0x88] sm:$0xff]
        %v305 = vld [vmem:[#allocation2 + $0x90] sm:$0xff]
        %v306 = vld [vmem:[#allocation2 + $0x98] sm:$0xff]
        %v307 = vld [vmem:[#allocation2 + $0xa0] sm:$0xff]
        %v308 = vld [vmem:[#allocation2 + $0xa8] sm:$0xff]
        %v309 = vld [vmem:[#allocation2 + $0xb0] sm:$0xff]
        %v310 = vld [vmem:[#allocation2 + $0xb8] sm:$0xff]
        %v311 = vld [vmem:[#allocation2 + $0xc0] sm:$0xff]
        %v312 = vld [vmem:[#allocation2 + $0xc8] sm:$0xff]
        %v313 = vld [vmem:[#allocation2 + $0xd0] sm:$0xff]
        %v314 = vld [vmem:[#allocation2 + $0xd8] sm:$0xff]
        %v315 = vld [vmem:[#allocation2 + $0xe0] sm:$0xff]
        %v316 = vld [vmem:[#allocation2 + $0xe8] sm:$0xff]
        %v317 = vld [vmem:[#allocation2 + $0xf0] sm:$0xff]
        %v318 = vld [vmem:[#allocation2 + $0xf8] sm:$0xff]
        %v319 = vld [vmem:[#allocation2 + $0x100] sm:$0xff]
        %v320 = vld [vmem:[#allocation2 + $0x108] sm:$0xff]
        %v321 = vld [vmem:[#allocation2 + $0x110] sm:$0xff]
        %v322 = vld [vmem:[#allocation2 + $0x118] sm:$0xff]
        %v323 = vld [vmem:[#allocation2 + $0x120] sm:$0xff]
        %v324 = vld [vmem:[#allocation2 + $0x128] sm:$0xff]
        %v325 = vld [vmem:[#allocation2 + $0x130] sm:$0xff]
        %v326 = vld [vmem:[#allocation2 + $0x138] sm:$0xff]
        %v327 = vld [vmem:[#allocation2 + $0x140] sm:$0xff]
        %v328 = vld [vmem:[#allocation2 + $0x148] sm:$0xff]
        %v329 = vld [vmem:[#allocation2 + $0x150] sm:$0xff]
        %v330 = vld [vmem:[#allocation2 + $0x158] sm:$0xff]
        %v331 = vld [vmem:[#allocation2 + $0x160] sm:$0xff]
        %v332 = vld [vmem:[#allocation2 + $0x168] sm:$0xff]
        %v333 = vld [vmem:[#allocation2 + $0x170] sm:$0xff]
        %v334 = vld [vmem:[#allocation2 + $0x178] sm:$0xff]
        %v335 = vld [vmem:[#allocation2 + $0x180] sm:$0xff]
        %v336 = vld [vmem:[#allocation2 + $0x188] sm:$0xff]
        %v337 = vld [vmem:[#allocation2 + $0x190] sm:$0xff]
        %v338 = vld [vmem:[#allocation2 + $0x198] sm:$0xff]
        %v339 = vld [vmem:[#allocation2 + $0x1a0] sm:$0xff]
        %v340 = vld [vmem:[#allocation2 + $0x1a8] sm:$0xff]
        %v341 = vld [vmem:[#allocation2 + $0x1b0] sm:$0xff]
        %v342 = vld [vmem:[#allocation2 + $0x1b8] sm:$0xff]
        %v343 = vld [vmem:[#allocation2 + $0x1c0] sm:$0xff]
        %v344 = vld [vmem:[#allocation2 + $0x1c8] sm:$0xff]
        %v345 = vld [vmem:[#allocation2 + $0x1d0] sm:$0xff]
        %v346 = vld [vmem:[#allocation2 + $0x1d8] sm:$0xff]
        %v347 = vld [vmem:[#allocation2 + $0x1e0] sm:$0xff]
        %v348 = vld [vmem:[#allocation2 + $0x1e8] sm:$0xff]
        %v349 = vld [vmem:[#allocation2 + $0x1f0] sm:$0xff]
        %v350 = vld [vmem:[#allocation2 + $0x1f8] sm:$0xff]
        %v351 = vld [vmem:[%s205] sm:$0xff]
        %v352 = vld [vmem:[%s205 + $0x8] sm:$0xff]
        %v353 = vld [vmem:[%s205 + $0x10] sm:$0xff]
        %v354 = vld [vmem:[%s205 + $0x18] sm:$0xff]
        %v355 = vld [vmem:[%s205 + $0x20] sm:$0xff]
        %v356 = vld [vmem:[%s205 + $0x28] sm:$0xff]
        %v357 = vld [vmem:[%s205 + $0x30] sm:$0xff]
        %v358 = vld [vmem:[%s205 + $0x38] sm:$0xff]
        %v359 = vld [vmem:[%s205 + $0x40] sm:$0xff]
        %v360 = vld [vmem:[%s205 + $0x48] sm:$0xff]
        %v361 = vld [vmem:[%s205 + $0x50] sm:$0xff]
        %v362 = vld [vmem:[%s205 + $0x58] sm:$0xff]
        %v363 = vld [vmem:[%s205 + $0x60] sm:$0xff]
        %v364 = vld [vmem:[%s205 + $0x68] sm:$0xff]
        %v365 = vld [vmem:[%s205 + $0x70] sm:$0xff]
        %v366 = vld [vmem:[%s205 + $0x78] sm:$0xff]
        %v367 = vld [vmem:[%s205 + $0x80] sm:$0xff]
        %v368 = vld [vmem:[%s205 + $0x88] sm:$0xff]
        %v369 = vld [vmem:[%s205 + $0x90] sm:$0xff]
        %v370 = vld [vmem:[%s205 + $0x98] sm:$0xff]
        %v371 = vld [vmem:[%s205 + $0xa0] sm:$0xff]
        %v372 = vld [vmem:[%s205 + $0xa8] sm:$0xff]
        %v373 = vld [vmem:[%s205 + $0xb0] sm:$0xff]
        %v374 = vld [vmem:[%s205 + $0xb8] sm:$0xff]
        %v375 = vld [vmem:[%s205 + $0xc0] sm:$0xff]
        %v376 = vld [vmem:[%s205 + $0xc8] sm:$0xff]
        %v377 = vld [vmem:[%s205 + $0xd0] sm:$0xff]
        %v378 = vld [vmem:[%s205 + $0xd8] sm:$0xff]
        %v379 = vld [vmem:[%s205 + $0xe0] sm:$0xff]
        %v380 = vld [vmem:[%s205 + $0xe8] sm:$0xff]
        %v381 = vld [vmem:[%s205 + $0xf0] sm:$0xff]
        %v382 = vld [vmem:[%s205 + $0xf8] sm:$0xff]
        %v383 = vld [vmem:[%s205 + $0x100] sm:$0xff]
        %v384 = vld [vmem:[%s205 + $0x108] sm:$0xff]
        %v385 = vld [vmem:[%s205 + $0x110] sm:$0xff]
        %v386 = vld [vmem:[%s205 + $0x118] sm:$0xff]
        %v387 = vld [vmem:[%s205 + $0x120] sm:$0xff]
        %v388 = vld [vmem:[%s205 + $0x128] sm:$0xff]
        %v389 = vld [vmem:[%s205 + $0x130] sm:$0xff]
        %v390 = vld [vmem:[%s205 + $0x138] sm:$0xff]
        %v391 = vld [vmem:[%s205 + $0x140] sm:$0xff]
        %v392 = vld [vmem:[%s205 + $0x148] sm:$0xff]
        %v393 = vld [vmem:[%s205 + $0x150] sm:$0xff]
        %v394 = vld [vmem:[%s205 + $0x158] sm:$0xff]
        %v395 = vld [vmem:[%s205 + $0x160] sm:$0xff]
        %v396 = vld [vmem:[%s205 + $0x168] sm:$0xff]
        %v397 = vld [vmem:[%s205 + $0x170] sm:$0xff]
        %v398 = vld [vmem:[%s205 + $0x178] sm:$0xff]
        %v399 = vld [vmem:[%s205 + $0x180] sm:$0xff]
        %v400 = vld [vmem:[%s205 + $0x188] sm:$0xff]
        %v401 = vld [vmem:[%s205 + $0x190] sm:$0xff]
        %v402 = vld [vmem:[%s205 + $0x198] sm:$0xff]
        %v403 = vld [vmem:[%s205 + $0x1a0] sm:$0xff]
        %v404 = vld [vmem:[%s205 + $0x1a8] sm:$0xff]
        %v405 = vld [vmem:[%s205 + $0x1b0] sm:$0xff]
        %v406 = vld [vmem:[%s205 + $0x1b8] sm:$0xff]
        %v407 = vld [vmem:[%s205 + $0x1c0] sm:$0xff]
        %v408 = vld [vmem:[%s205 + $0x1c8] sm:$0xff]
        %v409 = vld [vmem:[%s205 + $0x1d0] sm:$0xff]
        %v410 = vld [vmem:[%s205 + $0x1d8] sm:$0xff]
        %v411 = vld [vmem:[%s205 + $0x1e0] sm:$0xff]
        %v412 = vld [vmem:[%s205 + $0x1e8] sm:$0xff]
        %v413 = vld [vmem:[%s205 + $0x1f0] sm:$0xff]
        %v414 = vld [vmem:[%s205 + $0x1f8] sm:$0xff]
        %v415 = vld [vmem:[%s215] sm:$0xf]
        %v416 = vld [vmem:[%s215 + $0x4] sm:$0xf]
        %v417 = vld [vmem:[%s215 + $0x8] sm:$0xf]
        %v418 = vld [vmem:[%s215 + $0xc] sm:$0xf]
        %v419 = vld [vmem:[%s215 + $0x10] sm:$0xf]
        %v420 = vld [vmem:[%s215 + $0x14] sm:$0xf]
        %v421 = vld [vmem:[%s215 + $0x18] sm:$0xf]
        %v422 = vld [vmem:[%s215 + $0x1c] sm:$0xf]
        %v423 = vld [vmem:[%s215 + $0x20] sm:$0xf]
        %v424 = vld [vmem:[%s215 + $0x24] sm:$0xf]
        %v425 = vld [vmem:[%s215 + $0x28] sm:$0xf]
        %v426 = vld [vmem:[%s215 + $0x2c] sm:$0xf]
        %v427 = vld [vmem:[%s215 + $0x30] sm:$0xf]
        %v428 = vld [vmem:[%s215 + $0x34] sm:$0xf]
        %v429 = vld [vmem:[%s215 + $0x38] sm:$0xf]
        %v430 = vld [vmem:[%s215 + $0x3c] sm:$0xf]
        %v431 = vld [vmem:[%s215 + $0x40] sm:$0xf]
        %v432 = vld [vmem:[%s215 + $0x44] sm:$0xf]
        %v433 = vld [vmem:[%s215 + $0x48] sm:$0xf]
        %v434 = vld [vmem:[%s215 + $0x4c] sm:$0xf]
        %v435 = vld [vmem:[%s215 + $0x50] sm:$0xf]
        %v436 = vld [vmem:[%s215 + $0x54] sm:$0xf]
        %v437 = vld [vmem:[%s215 + $0x58] sm:$0xf]
        %v438 = vld [vmem:[%s215 + $0x5c] sm:$0xf]
        %v439 = vld [vmem:[%s215 + $0x60] sm:$0xf]
        %v440 = vld [vmem:[%s215 + $0x64] sm:$0xf]
        %v441 = vld [vmem:[%s215 + $0x68] sm:$0xf]
        %v442 = vld [vmem:[%s215 + $0x6c] sm:$0xf]
        %v443 = vld [vmem:[%s215 + $0x70] sm:$0xf]
        %v444 = vld [vmem:[%s215 + $0x74] sm:$0xf]
        %v445 = vld [vmem:[%s215 + $0x78] sm:$0xf]
        %v446 = vld [vmem:[%s215 + $0x7c] sm:$0xf]
        %v511 = vunpack.c.l.b16 %v351
        %v512 = vunpack.c.h.b16 %v351
        %v513 = vunpack.c.l.b16 %v352
        %v514 = vunpack.c.h.b16 %v352
        %v515 = vunpack.c.l.b16 %v353
        %v516 = vunpack.c.h.b16 %v353
        %v517 = vunpack.c.l.b16 %v354
        %v518 = vunpack.c.h.b16 %v354
        %v519 = vunpack.c.l.b16 %v355
        %v520 = vunpack.c.h.b16 %v355
        %v521 = vunpack.c.l.b16 %v356
        %v522 = vunpack.c.h.b16 %v356
        %v523 = vunpack.c.l.b16 %v357
        %v524 = vunpack.c.h.b16 %v357
        %v525 = vunpack.c.l.b16 %v358
        %v526 = vunpack.c.h.b16 %v358
        %v527 = vunpack.c.l.b16 %v359
        %v528 = vunpack.c.h.b16 %v359
        %v529 = vunpack.c.l.b16 %v360
        %v530 = vunpack.c.h.b16 %v360
        %v531 = vunpack.c.l.b16 %v361
        %v532 = vunpack.c.h.b16 %v361
        %v533 = vunpack.c.l.b16 %v362
        %v534 = vunpack.c.h.b16 %v362
        %v535 = vunpack.c.l.b16 %v363
        %v536 = vunpack.c.h.b16 %v363
        %v537 = vunpack.c.l.b16 %v364
        %v538 = vunpack.c.h.b16 %v364
        %v539 = vunpack.c.l.b16 %v365
        %v540 = vunpack.c.h.b16 %v365
        %v541 = vunpack.c.l.b16 %v366
        %v542 = vunpack.c.h.b16 %v366
        %v543 = vunpack.c.l.b16 %v367
        %v544 = vunpack.c.h.b16 %v367
        %v545 = vunpack.c.l.b16 %v368
        %v546 = vunpack.c.h.b16 %v368
        %v547 = vunpack.c.l.b16 %v369
        %v548 = vunpack.c.h.b16 %v369
        %v549 = vunpack.c.l.b16 %v370
        %v550 = vunpack.c.h.b16 %v370
        %v551 = vunpack.c.l.b16 %v371
        %v552 = vunpack.c.h.b16 %v371
        %v553 = vunpack.c.l.b16 %v372
        %v554 = vunpack.c.h.b16 %v372
        %v555 = vunpack.c.l.b16 %v373
        %v556 = vunpack.c.h.b16 %v373
        %v557 = vunpack.c.l.b16 %v374
        %v558 = vunpack.c.h.b16 %v374
        %v559 = vunpack.c.l.b16 %v375
        %v560 = vunpack.c.h.b16 %v375
        %v561 = vunpack.c.l.b16 %v376
        %v562 = vunpack.c.h.b16 %v376
        %v563 = vunpack.c.l.b16 %v377
        %v564 = vunpack.c.h.b16 %v377
        %v565 = vunpack.c.l.b16 %v378
        %v566 = vunpack.c.h.b16 %v378
        %v567 = vunpack.c.l.b16 %v379
        %v568 = vunpack.c.h.b16 %v379
        %v569 = vunpack.c.l.b16 %v380
        %v570 = vunpack.c.h.b16 %v380
        %v571 = vunpack.c.l.b16 %v381
        %v572 = vunpack.c.h.b16 %v381
        %v573 = vunpack.c.l.b16 %v382
        %v574 = vunpack.c.h.b16 %v382
        %v575 = vunpack.c.l.b16 %v383
        %v576 = vunpack.c.h.b16 %v383
        %v577 = vunpack.c.l.b16 %v384
        %v578 = vunpack.c.h.b16 %v384
        %v579 = vunpack.c.l.b16 %v385
        %v580 = vunpack.c.h.b16 %v385
        %v581 = vunpack.c.l.b16 %v386
        %v582 = vunpack.c.h.b16 %v386
        %v583 = vunpack.c.l.b16 %v387
        %v584 = vunpack.c.h.b16 %v387
        %v585 = vunpack.c.l.b16 %v388
        %v586 = vunpack.c.h.b16 %v388
        %v587 = vunpack.c.l.b16 %v389
        %v588 = vunpack.c.h.b16 %v389
        %v589 = vunpack.c.l.b16 %v390
        %v590 = vunpack.c.h.b16 %v390
        %v591 = vunpack.c.l.b16 %v391
        %v592 = vunpack.c.h.b16 %v391
        %v593 = vunpack.c.l.b16 %v392
        %v594 = vunpack.c.h.b16 %v392
        %v595 = vunpack.c.l.b16 %v393
        %v596 = vunpack.c.h.b16 %v393
        %v597 = vunpack.c.l.b16 %v394
        %v598 = vunpack.c.h.b16 %v394
        %v599 = vunpack.c.l.b16 %v395
        %v600 = vunpack.c.h.b16 %v395
        %v601 = vunpack.c.l.b16 %v396
        %v602 = vunpack.c.h.b16 %v396
        %v603 = vunpack.c.l.b16 %v397
        %v604 = vunpack.c.h.b16 %v397
        %v605 = vunpack.c.l.b16 %v398
        %v606 = vunpack.c.h.b16 %v398
        %v607 = vunpack.c.l.b16 %v399
        %v608 = vunpack.c.h.b16 %v399
        %v609 = vunpack.c.l.b16 %v400
        %v610 = vunpack.c.h.b16 %v400
        %v611 = vunpack.c.l.b16 %v401
        %v612 = vunpack.c.h.b16 %v401
        %v613 = vunpack.c.l.b16 %v402
        %v614 = vunpack.c.h.b16 %v402
        %v615 = vunpack.c.l.b16 %v403
        %v616 = vunpack.c.h.b16 %v403
        %v617 = vunpack.c.l.b16 %v404
        %v618 = vunpack.c.h.b16 %v404
        %v619 = vunpack.c.l.b16 %v405
        %v620 = vunpack.c.h.b16 %v405
        %v621 = vunpack.c.l.b16 %v406
        %v622 = vunpack.c.h.b16 %v406
        %v623 = vunpack.c.l.b16 %v407
        %v624 = vunpack.c.h.b16 %v407
        %v625 = vunpack.c.l.b16 %v408
        %v626 = vunpack.c.h.b16 %v408
        %v627 = vunpack.c.l.b16 %v409
        %v628 = vunpack.c.h.b16 %v409
        %v629 = vunpack.c.l.b16 %v410
        %v630 = vunpack.c.h.b16 %v410
        %v631 = vunpack.c.l.b16 %v411
        %v632 = vunpack.c.h.b16 %v411
        %v633 = vunpack.c.l.b16 %v412
        %v634 = vunpack.c.h.b16 %v412
        %v635 = vunpack.c.l.b16 %v413
        %v636 = vunpack.c.h.b16 %v413
        %v637 = vunpack.c.l.b16 %v414
        %v638 = vunpack.c.h.b16 %v414
        %v639 = vpack.c.b16 %v513, %v511
        %v640 = vpack.c.b16 %v514, %v512
        %v641 = vpack.c.b16 %v517, %v515
        %v642 = vpack.c.b16 %v518, %v516
        %v643 = vpack.c.b16 %v521, %v519
        %v644 = vpack.c.b16 %v522, %v520
        %v645 = vpack.c.b16 %v525, %v523
        %v646 = vpack.c.b16 %v526, %v524
        %v647 = vpack.c.b16 %v529, %v527
        %v648 = vpack.c.b16 %v530, %v528
        %v649 = vpack.c.b16 %v533, %v531
        %v650 = vpack.c.b16 %v534, %v532
        %v651 = vpack.c.b16 %v537, %v535
        %v652 = vpack.c.b16 %v538, %v536
        %v653 = vpack.c.b16 %v541, %v539
        %v654 = vpack.c.b16 %v542, %v540
        %v655 = vpack.c.b16 %v545, %v543
        %v656 = vpack.c.b16 %v546, %v544
        %v657 = vpack.c.b16 %v549, %v547
        %v658 = vpack.c.b16 %v550, %v548
        %v659 = vpack.c.b16 %v553, %v551
        %v660 = vpack.c.b16 %v554, %v552
        %v661 = vpack.c.b16 %v557, %v555
        %v662 = vpack.c.b16 %v558, %v556
        %v663 = vpack.c.b16 %v561, %v559
        %v664 = vpack.c.b16 %v562, %v560
        %v665 = vpack.c.b16 %v565, %v563
        %v666 = vpack.c.b16 %v566, %v564
        %v667 = vpack.c.b16 %v569, %v567
        %v668 = vpack.c.b16 %v570, %v568
        %v669 = vpack.c.b16 %v573, %v571
        %v670 = vpack.c.b16 %v574, %v572
        %v671 = vpack.c.b16 %v577, %v575
        %v672 = vpack.c.b16 %v578, %v576
        %v673 = vpack.c.b16 %v581, %v579
        %v674 = vpack.c.b16 %v582, %v580
        %v675 = vpack.c.b16 %v585, %v583
        %v676 = vpack.c.b16 %v586, %v584
        %v677 = vpack.c.b16 %v589, %v587
        %v678 = vpack.c.b16 %v590, %v588
        %v679 = vpack.c.b16 %v593, %v591
        %v680 = vpack.c.b16 %v594, %v592
        %v681 = vpack.c.b16 %v597, %v595
        %v682 = vpack.c.b16 %v598, %v596
        %v683 = vpack.c.b16 %v601, %v599
        %v684 = vpack.c.b16 %v602, %v600
        %v685 = vpack.c.b16 %v605, %v603
        %v686 = vpack.c.b16 %v606, %v604
        %v687 = vpack.c.b16 %v609, %v607
        %v688 = vpack.c.b16 %v610, %v608
        %v689 = vpack.c.b16 %v613, %v611
        %v690 = vpack.c.b16 %v614, %v612
        %v691 = vpack.c.b16 %v617, %v615
        %v692 = vpack.c.b16 %v618, %v616
        %v693 = vpack.c.b16 %v621, %v619
        %v694 = vpack.c.b16 %v622, %v620
        %v695 = vpack.c.b16 %v625, %v623
        %v696 = vpack.c.b16 %v626, %v624
        %v697 = vpack.c.b16 %v629, %v627
        %v698 = vpack.c.b16 %v630, %v628
        %v699 = vpack.c.b16 %v633, %v631
        %v700 = vpack.c.b16 %v634, %v632
        %v701 = vpack.c.b16 %v637, %v635
        %v702 = vpack.c.b16 %v638, %v636
        %v799 = vunpack.c.l.b16 %v415
        %v800 = vunpack.c.l.b16 %v416
        %v801 = vunpack.c.l.b16 %v417
        %v802 = vunpack.c.l.b16 %v418
        %v803 = vunpack.c.l.b16 %v419
        %v804 = vunpack.c.l.b16 %v420
        %v805 = vunpack.c.l.b16 %v421
        %v806 = vunpack.c.l.b16 %v422
        %v807 = vunpack.c.l.b16 %v423
        %v808 = vunpack.c.l.b16 %v424
        %v809 = vunpack.c.l.b16 %v425
        %v810 = vunpack.c.l.b16 %v426
        %v811 = vunpack.c.l.b16 %v427
        %v812 = vunpack.c.l.b16 %v428
        %v813 = vunpack.c.l.b16 %v429
        %v814 = vunpack.c.l.b16 %v430
        %v815 = vunpack.c.l.b16 %v431
        %v816 = vunpack.c.l.b16 %v432
        %v817 = vunpack.c.l.b16 %v433
        %v818 = vunpack.c.l.b16 %v434
        %v819 = vunpack.c.l.b16 %v435
        %v820 = vunpack.c.l.b16 %v436
        %v821 = vunpack.c.l.b16 %v437
        %v822 = vunpack.c.l.b16 %v438
        %v823 = vunpack.c.l.b16 %v439
        %v824 = vunpack.c.l.b16 %v440
        %v825 = vunpack.c.l.b16 %v441
        %v826 = vunpack.c.l.b16 %v442
        %v827 = vunpack.c.l.b16 %v443
        %v828 = vunpack.c.l.b16 %v444
        %v829 = vunpack.c.l.b16 %v445
        %v830 = vunpack.c.l.b16 %v446
        %v831 = vpack.c.b16 %v800, %v799
        %v832 = vpack.c.b16 %v802, %v801
        %v833 = vpack.c.b16 %v804, %v803
        %v834 = vpack.c.b16 %v806, %v805
        %v835 = vpack.c.b16 %v808, %v807
        %v836 = vpack.c.b16 %v810, %v809
        %v837 = vpack.c.b16 %v812, %v811
        %v838 = vpack.c.b16 %v814, %v813
        %v839 = vpack.c.b16 %v816, %v815
        %v840 = vpack.c.b16 %v818, %v817
        %v841 = vpack.c.b16 %v820, %v819
        %v842 = vpack.c.b16 %v822, %v821
        %v843 = vpack.c.b16 %v824, %v823
        %v844 = vpack.c.b16 %v826, %v825
        %v845 = vpack.c.b16 %v828, %v827
        %v846 = vpack.c.b16 %v830, %v829
        %863 = vmatprep.subr.bf16.mxu0 0
        %864 = vmatpush1.bf16.msra.mxu0 %v831
        %865 = vmatprep.subr.bf16.mxu0 0
        %866 = vmatpush1.bf16.msra.mxu0 %v832
        %867 = vmatprep.subr.bf16.mxu0 0
        %868 = vmatpush1.bf16.msra.mxu0 %v833
        %869 = vmatprep.subr.bf16.mxu0 0
        %870 = vmatpush1.bf16.msra.mxu0 %v834
        %871 = vmatprep.subr.bf16.mxu0 0
        %872 = vmatpush1.bf16.msra.mxu0 %v835
        %873 = vmatprep.subr.bf16.mxu0 0
        %874 = vmatpush1.bf16.msra.mxu0 %v836
        %875 = vmatprep.subr.bf16.mxu0 0
        %876 = vmatpush1.bf16.msra.mxu0 %v837
        %877 = vmatprep.subr.bf16.mxu0 0
        %878 = vmatpush1.bf16.msra.mxu0 %v838
        %879 = vmatprep.subr.bf16.mxu0 0
        %880 = vmatpush1.bf16.msra.mxu0 %v839
        %881 = vmatprep.subr.bf16.mxu0 0
        %882 = vmatpush1.bf16.msra.mxu0 %v840
        %883 = vmatprep.subr.bf16.mxu0 0
        %884 = vmatpush1.bf16.msra.mxu0 %v841
        %885 = vmatprep.subr.bf16.mxu0 0
        %886 = vmatpush1.bf16.msra.mxu0 %v842
        %887 = vmatprep.subr.bf16.mxu0 0
        %888 = vmatpush1.bf16.msra.mxu0 %v843
        %889 = vmatprep.subr.bf16.mxu0 0
        %890 = vmatpush1.bf16.msra.mxu0 %v844
        %891 = vmatprep.subr.bf16.mxu0 0
        %892 = vmatpush1.bf16.msra.mxu0 %v845
        %893 = vmatprep.subr.bf16.mxu0 0
        %894 = vmatpush1.bf16.msra.mxu0 %v846
        %895 = vmatprep.mubr.bf16.mxu0 %v640
        %896 = vmatmul.mubr.bf16.gmra.mrb[0].mxu0 %v639
        %v897 = vpop.f32.mrb[0].mxu0
        %v898 = vadd.f32 0.0, %v897
        %v899 = vpop.f32.mrb[0].mxu0
        %v900 = vpop.f32.mrb[0].mxu0
        %v901 = vadd.f32 0.0, %v900
        %v902 = vpop.f32.mrb[0].mxu0
        %903 = vmatprep.mubr.bf16.mxu0 %v642
        %904 = vmatmul.mubr.bf16.gmra.mrb[0].mxu0 %v641
        %v905 = vpop.f32.mrb[0].mxu0
        %v906 = vadd.f32 0.0, %v905
        %v907 = vpop.f32.mrb[0].mxu0
        %v908 = vpop.f32.mrb[0].mxu0
        %v909 = vadd.f32 0.0, %v908
        %v910 = vpop.f32.mrb[0].mxu0
        %911 = vmatprep.mubr.bf16.mxu0 %v644
        %912 = vmatmul.mubr.bf16.gmra.mrb[0].mxu0 %v643
        %v913 = vpop.f32.mrb[0].mxu0
        %v914 = vadd.f32 0.0, %v913
        %v915 = vpop.f32.mrb[0].mxu0
        %v916 = vpop.f32.mrb[0].mxu0
        %v917 = vadd.f32 0.0, %v916
        %v918 = vpop.f32.mrb[0].mxu0
        %919 = vmatprep.mubr.bf16.mxu0 %v646
        %920 = vmatmul.mubr.bf16.gmra.mrb[0].mxu0 %v645
        %v921 = vpop.f32.mrb[0].mxu0
        %v922 = vadd.f32 0.0, %v921
        %v923 = vpop.f32.mrb[0].mxu0
        %v924 = vpop.f32.mrb[0].mxu0
        %v925 = vadd.f32 0.0, %v924
        %v926 = vpop.f32.mrb[0].mxu0
        %927 = vmatprep.mubr.bf16.mxu0 %v648
        %928 = vmatmul.mubr.bf16.gmra.mrb[0].mxu0 %v647
        %v929 = vpop.f32.mrb[0].mxu0
        %v930 = vadd.f32 0.0, %v929
        %v931 = vpop.f32.mrb[0].mxu0
        %v932 = vpop.f32.mrb[0].mxu0
        %v933 = vadd.f32 0.0, %v932
        %v934 = vpop.f32.mrb[0].mxu0
        %935 = vmatprep.mubr.bf16.mxu0 %v650
        %936 = vmatmul.mubr.bf16.gmra.mrb[0].mxu0 %v649
        %v937 = vpop.f32.mrb[0].mxu0
        %v938 = vadd.f32 0.0, %v937
        %v939 = vpop.f32.mrb[0].mxu0
        %v940 = vpop.f32.mrb[0].mxu0
        %v941 = vadd.f32 0.0, %v940
        %v942 = vpop.f32.mrb[0].mxu0
        %943 = vmatprep.mubr.bf16.mxu0 %v652
        %944 = vmatmul.mubr.bf16.gmra.mrb[0].mxu0 %v651
        %v945 = vpop.f32.mrb[0].mxu0
        %v946 = vadd.f32 0.0, %v945
        %v947 = vpop.f32.mrb[0].mxu0
        %v948 = vpop.f32.mrb[0].mxu0
        %v949 = vadd.f32 0.0, %v948
        %v950 = vpop.f32.mrb[0].mxu0
        %951 = vmatprep.mubr.bf16.mxu0 %v654
        %952 = vmatmul.mubr.bf16.gmra.mrb[0].mxu0 %v653
        %v953 = vpop.f32.mrb[0].mxu0
        %v954 = vadd.f32 0.0, %v953
        %v955 = vpop.f32.mrb[0].mxu0
        %v956 = vpop.f32.mrb[0].mxu0
        %v957 = vadd.f32 0.0, %v956
        %v958 = vpop.f32.mrb[0].mxu0
        %959 = vmatprep.mubr.bf16.mxu0 %v656
        %960 = vmatmul.mubr.bf16.gmra.mrb[0].mxu0 %v655
        %v961 = vpop.f32.mrb[0].mxu0
        %v962 = vadd.f32 0.0, %v961
        %v963 = vpop.f32.mrb[0].mxu0
        %v964 = vpop.f32.mrb[0].mxu0
        %v965 = vadd.f32 0.0, %v964
        %v966 = vpop.f32.mrb[0].mxu0
        %967 = vmatprep.mubr.bf16.mxu0 %v658
        %968 = vmatmul.mubr.bf16.gmra.mrb[0].mxu0 %v657
        %v969 = vpop.f32.mrb[0].mxu0
        %v970 = vadd.f32 0.0, %v969
        %v971 = vpop.f32.mrb[0].mxu0
        %v972 = vpop.f32.mrb[0].mxu0
        %v973 = vadd.f32 0.0, %v972
        %v974 = vpop.f32.mrb[0].mxu0
        %975 = vmatprep.mubr.bf16.mxu0 %v660
        %976 = vmatmul.mubr.bf16.gmra.mrb[0].mxu0 %v659
        %v977 = vpop.f32.mrb[0].mxu0
        %v978 = vadd.f32 0.0, %v977
        %v979 = vpop.f32.mrb[0].mxu0
        %v980 = vpop.f32.mrb[0].mxu0
        %v981 = vadd.f32 0.0, %v980
        %v982 = vpop.f32.mrb[0].mxu0
        %983 = vmatprep.mubr.bf16.mxu0 %v662
        %984 = vmatmul.mubr.bf16.gmra.mrb[0].mxu0 %v661
        %v985 = vpop.f32.mrb[0].mxu0
        %v986 = vadd.f32 0.0, %v985
        %v987 = vpop.f32.mrb[0].mxu0
        %v988 = vpop.f32.mrb[0].mxu0
        %v989 = vadd.f32 0.0, %v988
        %v990 = vpop.f32.mrb[0].mxu0
        %991 = vmatprep.mubr.bf16.mxu0 %v664
        %992 = vmatmul.mubr.bf16.gmra.mrb[0].mxu0 %v663
        %v993 = vpop.f32.mrb[0].mxu0
        %v994 = vadd.f32 0.0, %v993
        %v995 = vpop.f32.mrb[0].mxu0
        %v996 = vpop.f32.mrb[0].mxu0
        %v997 = vadd.f32 0.0, %v996
        %v998 = vpop.f32.mrb[0].mxu0
        %999 = vmatprep.mubr.bf16.mxu0 %v666
        %1000 = vmatmul.mubr.bf16.gmra.mrb[0].mxu0 %v665
        %v1001 = vpop.f32.mrb[0].mxu0
        %v1002 = vadd.f32 0.0, %v1001
        %v1003 = vpop.f32.mrb[0].mxu0
        %v1004 = vpop.f32.mrb[0].mxu0
        %v1005 = vadd.f32 0.0, %v1004
        %v1006 = vpop.f32.mrb[0].mxu0
        %1007 = vmatprep.mubr.bf16.mxu0 %v668
        %1008 = vmatmul.mubr.bf16.gmra.mrb[0].mxu0 %v667
        %v1009 = vpop.f32.mrb[0].mxu0
        %v1010 = vadd.f32 0.0, %v1009
        %v1011 = vpop.f32.mrb[0].mxu0
        %v1012 = vpop.f32.mrb[0].mxu0
        %v1013 = vadd.f32 0.0, %v1012
        %v1014 = vpop.f32.mrb[0].mxu0
        %1015 = vmatprep.mubr.bf16.mxu0 %v670
        %1016 = vmatmul.mubr.bf16.gmra.mrb[0].mxu0 %v669
        %v1017 = vpop.f32.mrb[0].mxu0
        %v1018 = vadd.f32 0.0, %v1017
        %v1019 = vpop.f32.mrb[0].mxu0
        %v1020 = vpop.f32.mrb[0].mxu0
        %v1021 = vadd.f32 0.0, %v1020
        %v1022 = vpop.f32.mrb[0].mxu0
        %1023 = vmatprep.mubr.bf16.mxu0 %v672
        %1024 = vmatmul.mubr.bf16.gmra.mrb[0].mxu0 %v671
        %v1025 = vpop.f32.mrb[0].mxu0
        %v1026 = vadd.f32 0.0, %v1025
        %v1027 = vpop.f32.mrb[0].mxu0
        %v1028 = vpop.f32.mrb[0].mxu0
        %v1029 = vadd.f32 0.0, %v1028
        %v1030 = vpop.f32.mrb[0].mxu0
        %1031 = vmatprep.mubr.bf16.mxu0 %v674
        %1032 = vmatmul.mubr.bf16.gmra.mrb[0].mxu0 %v673
        %v1033 = vpop.f32.mrb[0].mxu0
        %v1034 = vadd.f32 0.0, %v1033
        %v1035 = vpop.f32.mrb[0].mxu0
        %v1036 = vpop.f32.mrb[0].mxu0
        %v1037 = vadd.f32 0.0, %v1036
        %v1038 = vpop.f32.mrb[0].mxu0
        %1039 = vmatprep.mubr.bf16.mxu0 %v676
        %1040 = vmatmul.mubr.bf16.gmra.mrb[0].mxu0 %v675
        %v1041 = vpop.f32.mrb[0].mxu0
        %v1042 = vadd.f32 0.0, %v1041
        %v1043 = vpop.f32.mrb[0].mxu0
        %v1044 = vpop.f32.mrb[0].mxu0
        %v1045 = vadd.f32 0.0, %v1044
        %v1046 = vpop.f32.mrb[0].mxu0
        %1047 = vmatprep.mubr.bf16.mxu0 %v678
        %1048 = vmatmul.mubr.bf16.gmra.mrb[0].mxu0 %v677
        %v1049 = vpop.f32.mrb[0].mxu0
        %v1050 = vadd.f32 0.0, %v1049
        %v1051 = vpop.f32.mrb[0].mxu0
        %v1052 = vpop.f32.mrb[0].mxu0
        %v1053 = vadd.f32 0.0, %v1052
        %v1054 = vpop.f32.mrb[0].mxu0
        %1055 = vmatprep.mubr.bf16.mxu0 %v680
        %1056 = vmatmul.mubr.bf16.gmra.mrb[0].mxu0 %v679
        %v1057 = vpop.f32.mrb[0].mxu0
        %v1058 = vadd.f32 0.0, %v1057
        %v1059 = vpop.f32.mrb[0].mxu0
        %v1060 = vpop.f32.mrb[0].mxu0
        %v1061 = vadd.f32 0.0, %v1060
        %v1062 = vpop.f32.mrb[0].mxu0
        %1063 = vmatprep.mubr.bf16.mxu0 %v682
        %1064 = vmatmul.mubr.bf16.gmra.mrb[0].mxu0 %v681
        %v1065 = vpop.f32.mrb[0].mxu0
        %v1066 = vadd.f32 0.0, %v1065
        %v1067 = vpop.f32.mrb[0].mxu0
        %v1068 = vpop.f32.mrb[0].mxu0
        %v1069 = vadd.f32 0.0, %v1068
        %v1070 = vpop.f32.mrb[0].mxu0
        %1071 = vmatprep.mubr.bf16.mxu0 %v684
        %1072 = vmatmul.mubr.bf16.gmra.mrb[0].mxu0 %v683
        %v1073 = vpop.f32.mrb[0].mxu0
        %v1074 = vadd.f32 0.0, %v1073
        %v1075 = vpop.f32.mrb[0].mxu0
        %v1076 = vpop.f32.mrb[0].mxu0
        %v1077 = vadd.f32 0.0, %v1076
        %v1078 = vpop.f32.mrb[0].mxu0
        %1079 = vmatprep.mubr.bf16.mxu0 %v686
        %1080 = vmatmul.mubr.bf16.gmra.mrb[0].mxu0 %v685
        %v1081 = vpop.f32.mrb[0].mxu0
        %v1082 = vadd.f32 0.0, %v1081
        %v1083 = vpop.f32.mrb[0].mxu0
        %v1084 = vpop.f32.mrb[0].mxu0
        %v1085 = vadd.f32 0.0, %v1084
        %v1086 = vpop.f32.mrb[0].mxu0
        %1087 = vmatprep.mubr.bf16.mxu0 %v688
        %1088 = vmatmul.mubr.bf16.gmra.mrb[0].mxu0 %v687
        %v1089 = vpop.f32.mrb[0].mxu0
        %v1090 = vadd.f32 0.0, %v1089
        %v1091 = vpop.f32.mrb[0].mxu0
        %v1092 = vpop.f32.mrb[0].mxu0
        %v1093 = vadd.f32 0.0, %v1092
        %v1094 = vpop.f32.mrb[0].mxu0
        %1095 = vmatprep.mubr.bf16.mxu0 %v690
        %1096 = vmatmul.mubr.bf16.gmra.mrb[0].mxu0 %v689
        %v1097 = vpop.f32.mrb[0].mxu0
        %v1098 = vadd.f32 0.0, %v1097
        %v1099 = vpop.f32.mrb[0].mxu0
        %v1100 = vpop.f32.mrb[0].mxu0
        %v1101 = vadd.f32 0.0, %v1100
        %v1102 = vpop.f32.mrb[0].mxu0
        %1103 = vmatprep.mubr.bf16.mxu0 %v692
        %1104 = vmatmul.mubr.bf16.gmra.mrb[0].mxu0 %v691
        %v1105 = vpop.f32.mrb[0].mxu0
        %v1106 = vadd.f32 0.0, %v1105
        %v1107 = vpop.f32.mrb[0].mxu0
        %v1108 = vpop.f32.mrb[0].mxu0
        %v1109 = vadd.f32 0.0, %v1108
        %v1110 = vpop.f32.mrb[0].mxu0
        %1111 = vmatprep.mubr.bf16.mxu0 %v694
        %1112 = vmatmul.mubr.bf16.gmra.mrb[0].mxu0 %v693
        %v1113 = vpop.f32.mrb[0].mxu0
        %v1114 = vadd.f32 0.0, %v1113
        %v1115 = vpop.f32.mrb[0].mxu0
        %v1116 = vpop.f32.mrb[0].mxu0
        %v1117 = vadd.f32 0.0, %v1116
        %v1118 = vpop.f32.mrb[0].mxu0
        %1119 = vmatprep.mubr.bf16.mxu0 %v696
        %1120 = vmatmul.mubr.bf16.gmra.mrb[0].mxu0 %v695
        %v1121 = vpop.f32.mrb[0].mxu0
        %v1122 = vadd.f32 0.0, %v1121
        %v1123 = vpop.f32.mrb[0].mxu0
        %v1124 = vpop.f32.mrb[0].mxu0
        %v1125 = vadd.f32 0.0, %v1124
        %v1126 = vpop.f32.mrb[0].mxu0
        %1127 = vmatprep.mubr.bf16.mxu0 %v698
        %1128 = vmatmul.mubr.bf16.gmra.mrb[0].mxu0 %v697
        %v1129 = vpop.f32.mrb[0].mxu0
        %v1130 = vadd.f32 0.0, %v1129
        %v1131 = vpop.f32.mrb[0].mxu0
        %v1132 = vpop.f32.mrb[0].mxu0
        %v1133 = vadd.f32 0.0, %v1132
        %v1134 = vpop.f32.mrb[0].mxu0
        %1135 = vmatprep.mubr.bf16.mxu0 %v700
        %1136 = vmatmul.mubr.bf16.gmra.mrb[0].mxu0 %v699
        %v1137 = vpop.f32.mrb[0].mxu0
        %v1138 = vadd.f32 0.0, %v1137
        %v1139 = vpop.f32.mrb[0].mxu0
        %v1140 = vpop.f32.mrb[0].mxu0
        %v1141 = vadd.f32 0.0, %v1140
        %v1142 = vpop.f32.mrb[0].mxu0
        %1143 = vmatprep.mubr.bf16.mxu0 %v702
        %1144 = vmatmul.mubr.bf16.gmra.mrb[0].mxu0 %v701
        %v1145 = vpop.f32.mrb[0].mxu0
        %v1146 = vadd.f32 0.0, %v1145
        %v1147 = vpop.f32.mrb[0].mxu0
        %v1148 = vpop.f32.mrb[0].mxu0
        %v1149 = vadd.f32 0.0, %v1148
        %v1150 = vpop.f32.mrb[0].mxu0
        %1151 = vdwg.mxu0
        %v1152 = vadd.f32 %v287, %v898
        %v1153 = vadd.f32 %v288, %v901
        %v1154 = vadd.f32 %v289, %v906
        %v1155 = vadd.f32 %v290, %v909
        %v1156 = vadd.f32 %v291, %v914
        %v1157 = vadd.f32 %v292, %v917
        %v1158 = vadd.f32 %v293, %v922
        %v1159 = vadd.f32 %v294, %v925
        %v1160 = vadd.f32 %v295, %v930
        %v1161 = vadd.f32 %v296, %v933
        %v1162 = vadd.f32 %v297, %v938
        %v1163 = vadd.f32 %v298, %v941
        %v1164 = vadd.f32 %v299, %v946
        %v1165 = vadd.f32 %v300, %v949
        %v1166 = vadd.f32 %v301, %v954
        %v1167 = vadd.f32 %v302, %v957
        %v1168 = vadd.f32 %v303, %v962
        %v1169 = vadd.f32 %v304, %v965
        %v1170 = vadd.f32 %v305, %v970
        %v1171 = vadd.f32 %v306, %v973
        %v1172 = vadd.f32 %v307, %v978
        %v1173 = vadd.f32 %v308, %v981
        %v1174 = vadd.f32 %v309, %v986
        %v1175 = vadd.f32 %v310, %v989
        %v1176 = vadd.f32 %v311, %v994
        %v1177 = vadd.f32 %v312, %v997
        %v1178 = vadd.f32 %v313, %v1002
        %v1179 = vadd.f32 %v314, %v1005
        %v1180 = vadd.f32 %v315, %v1010
        %v1181 = vadd.f32 %v316, %v1013
        %v1182 = vadd.f32 %v317, %v1018
        %v1183 = vadd.f32 %v318, %v1021
        %v1184 = vadd.f32 %v319, %v1026
        %v1185 = vadd.f32 %v320, %v1029
        %v1186 = vadd.f32 %v321, %v1034
        %v1187 = vadd.f32 %v322, %v1037
        %v1188 = vadd.f32 %v323, %v1042
        %v1189 = vadd.f32 %v324, %v1045
        %v1190 = vadd.f32 %v325, %v1050
        %v1191 = vadd.f32 %v326, %v1053
        %v1192 = vadd.f32 %v327, %v1058
        %v1193 = vadd.f32 %v328, %v1061
        %v1194 = vadd.f32 %v329, %v1066
        %v1195 = vadd.f32 %v330, %v1069
        %v1196 = vadd.f32 %v331, %v1074
        %v1197 = vadd.f32 %v332, %v1077
        %v1198 = vadd.f32 %v333, %v1082
        %v1199 = vadd.f32 %v334, %v1085
        %v1200 = vadd.f32 %v335, %v1090
        %v1201 = vadd.f32 %v336, %v1093
        %v1202 = vadd.f32 %v337, %v1098
        %v1203 = vadd.f32 %v338, %v1101
        %v1204 = vadd.f32 %v339, %v1106
        %v1205 = vadd.f32 %v340, %v1109
        %v1206 = vadd.f32 %v341, %v1114
        %v1207 = vadd.f32 %v342, %v1117
        %v1208 = vadd.f32 %v343, %v1122
        %v1209 = vadd.f32 %v344, %v1125
        %v1210 = vadd.f32 %v345, %v1130
        %v1211 = vadd.f32 %v346, %v1133
        %v1212 = vadd.f32 %v347, %v1138
        %v1213 = vadd.f32 %v348, %v1141
        %v1214 = vadd.f32 %v349, %v1146
        %v1215 = vadd.f32 %v350, %v1149
        %1216 = vst [vmem:[#allocation2] sm:$0xff] %v1152
        %1217 = vst [vmem:[#allocation2 + $0x8] sm:$0xff] %v1153
        %1218 = vst [vmem:[#allocation2 + $0x10] sm:$0xff] %v1154
        %1219 = vst [vmem:[#allocation2 + $0x18] sm:$0xff] %v1155
        %1220 = vst [vmem:[#allocation2 + $0x20] sm:$0xff] %v1156
        %1221 = vst [vmem:[#allocation2 + $0x28] sm:$0xff] %v1157
        %1222 = vst [vmem:[#allocation2 + $0x30] sm:$0xff] %v1158
        %1223 = vst [vmem:[#allocation2 + $0x38] sm:$0xff] %v1159
        %1224 = vst [vmem:[#allocation2 + $0x40] sm:$0xff] %v1160
        %1225 = vst [vmem:[#allocation2 + $0x48] sm:$0xff] %v1161
        %1226 = vst [vmem:[#allocation2 + $0x50] sm:$0xff] %v1162
        %1227 = vst [vmem:[#allocation2 + $0x58] sm:$0xff] %v1163
        %1228 = vst [vmem:[#allocation2 + $0x60] sm:$0xff] %v1164
        %1229 = vst [vmem:[#allocation2 + $0x68] sm:$0xff] %v1165
        %1230 = vst [vmem:[#allocation2 + $0x70] sm:$0xff] %v1166
        %1231 = vst [vmem:[#allocation2 + $0x78] sm:$0xff] %v1167
        %1232 = vst [vmem:[#allocation2 + $0x80] sm:$0xff] %v1168
        %1233 = vst [vmem:[#allocation2 + $0x88] sm:$0xff] %v1169
        %1234 = vst [vmem:[#allocation2 + $0x90] sm:$0xff] %v1170
        %1235 = vst [vmem:[#allocation2 + $0x98] sm:$0xff] %v1171
        %1236 = vst [vmem:[#allocation2 + $0xa0] sm:$0xff] %v1172
        %1237 = vst [vmem:[#allocation2 + $0xa8] sm:$0xff] %v1173
        %1238 = vst [vmem:[#allocation2 + $0xb0] sm:$0xff] %v1174
        %1239 = vst [vmem:[#allocation2 + $0xb8] sm:$0xff] %v1175
        %1240 = vst [vmem:[#allocation2 + $0xc0] sm:$0xff] %v1176
        %1241 = vst [vmem:[#allocation2 + $0xc8] sm:$0xff] %v1177
        %1242 = vst [vmem:[#allocation2 + $0xd0] sm:$0xff] %v1178
        %1243 = vst [vmem:[#allocation2 + $0xd8] sm:$0xff] %v1179
        %1244 = vst [vmem:[#allocation2 + $0xe0] sm:$0xff] %v1180
        %1245 = vst [vmem:[#allocation2 + $0xe8] sm:$0xff] %v1181
        %1246 = vst [vmem:[#allocation2 + $0xf0] sm:$0xff] %v1182
        %1247 = vst [vmem:[#allocation2 + $0xf8] sm:$0xff] %v1183
        %1248 = vst [vmem:[#allocation2 + $0x100] sm:$0xff] %v1184
        %1249 = vst [vmem:[#allocation2 + $0x108] sm:$0xff] %v1185
        %1250 = vst [vmem:[#allocation2 + $0x110] sm:$0xff] %v1186
        %1251 = vst [vmem:[#allocation2 + $0x118] sm:$0xff] %v1187
        %1252 = vst [vmem:[#allocation2 + $0x120] sm:$0xff] %v1188
        %1253 = vst [vmem:[#allocation2 + $0x128] sm:$0xff] %v1189
        %1254 = vst [vmem:[#allocation2 + $0x130] sm:$0xff] %v1190
        %1255 = vst [vmem:[#allocation2 + $0x138] sm:$0xff] %v1191
        %1256 = vst [vmem:[#allocation2 + $0x140] sm:$0xff] %v1192
        %1257 = vst [vmem:[#allocation2 + $0x148] sm:$0xff] %v1193
        %1258 = vst [vmem:[#allocation2 + $0x150] sm:$0xff] %v1194
        %1259 = vst [vmem:[#allocation2 + $0x158] sm:$0xff] %v1195
        %1260 = vst [vmem:[#allocation2 + $0x160] sm:$0xff] %v1196
        %1261 = vst [vmem:[#allocation2 + $0x168] sm:$0xff] %v1197
        %1262 = vst [vmem:[#allocation2 + $0x170] sm:$0xff] %v1198
        %1263 = vst [vmem:[#allocation2 + $0x178] sm:$0xff] %v1199
        %1264 = vst [vmem:[#allocation2 + $0x180] sm:$0xff] %v1200
        %1265 = vst [vmem:[#allocation2 + $0x188] sm:$0xff] %v1201
        %1266 = vst [vmem:[#allocation2 + $0x190] sm:$0xff] %v1202
        %1267 = vst [vmem:[#allocation2 + $0x198] sm:$0xff] %v1203
        %1268 = vst [vmem:[#allocation2 + $0x1a0] sm:$0xff] %v1204
        %1269 = vst [vmem:[#allocation2 + $0x1a8] sm:$0xff] %v1205
        %1270 = vst [vmem:[#allocation2 + $0x1b0] sm:$0xff] %v1206
        %1271 = vst [vmem:[#allocation2 + $0x1b8] sm:$0xff] %v1207
        %1272 = vst [vmem:[#allocation2 + $0x1c0] sm:$0xff] %v1208
        %1273 = vst [vmem:[#allocation2 + $0x1c8] sm:$0xff] %v1209
        %1274 = vst [vmem:[#allocation2 + $0x1d0] sm:$0xff] %v1210
        %1275 = vst [vmem:[#allocation2 + $0x1d8] sm:$0xff] %v1211
        %1276 = vst [vmem:[#allocation2 + $0x1e0] sm:$0xff] %v1212
        %1277 = vst [vmem:[#allocation2 + $0x1e8] sm:$0xff] %v1213
        %1278 = vst [vmem:[#allocation2 + $0x1f0] sm:$0xff] %v1214
        %1279 = vst [vmem:[#allocation2 + $0x1f8] sm:$0xff] %v1215
        // Predicated region
        $region33: #{conv_matmul.1} parent=27 // pred_check
          %p1280 = pneg %p219
        $region34: #{conv_matmul.1} parent=27 // pred_check_branch
          %1282 = sbr.rel (%p1280) target = $region36
        $region35: #{conv_matmul.1} parent=27 // pred_region
          %v1283 = vld [vmem:[#allocation2] sm:$0xff]
          %v1284 = vld [vmem:[#allocation2 + $0x8] sm:$0xff]
          %v1285 = vld [vmem:[#allocation2 + $0x10] sm:$0xff]
          %v1286 = vld [vmem:[#allocation2 + $0x18] sm:$0xff]
          %v1287 = vld [vmem:[#allocation2 + $0x20] sm:$0xff]
          %v1288 = vld [vmem:[#allocation2 + $0x28] sm:$0xff]
          %v1289 = vld [vmem:[#allocation2 + $0x30] sm:$0xff]
          %v1290 = vld [vmem:[#allocation2 + $0x38] sm:$0xff]
          %v1291 = vld [vmem:[#allocation2 + $0x40] sm:$0xff]
          %v1292 = vld [vmem:[#allocation2 + $0x48] sm:$0xff]
          %v1293 = vld [vmem:[#allocation2 + $0x50] sm:$0xff]
          %v1294 = vld [vmem:[#allocation2 + $0x58] sm:$0xff]
          %v1295 = vld [vmem:[#allocation2 + $0x60] sm:$0xff]
          %v1296 = vld [vmem:[#allocation2 + $0x68] sm:$0xff]
          %v1297 = vld [vmem:[#allocation2 + $0x70] sm:$0xff]
          %v1298 = vld [vmem:[#allocation2 + $0x78] sm:$0xff]
          %v1299 = vld [vmem:[#allocation2 + $0x80] sm:$0xff]
          %v1300 = vld [vmem:[#allocation2 + $0x88] sm:$0xff]
          %v1301 = vld [vmem:[#allocation2 + $0x90] sm:$0xff]
          %v1302 = vld [vmem:[#allocation2 + $0x98] sm:$0xff]
          %v1303 = vld [vmem:[#allocation2 + $0xa0] sm:$0xff]
          %v1304 = vld [vmem:[#allocation2 + $0xa8] sm:$0xff]
          %v1305 = vld [vmem:[#allocation2 + $0xb0] sm:$0xff]
          %v1306 = vld [vmem:[#allocation2 + $0xb8] sm:$0xff]
          %v1307 = vld [vmem:[#allocation2 + $0xc0] sm:$0xff]
          %v1308 = vld [vmem:[#allocation2 + $0xc8] sm:$0xff]
          %v1309 = vld [vmem:[#allocation2 + $0xd0] sm:$0xff]
          %v1310 = vld [vmem:[#allocation2 + $0xd8] sm:$0xff]
          %v1311 = vld [vmem:[#allocation2 + $0xe0] sm:$0xff]
          %v1312 = vld [vmem:[#allocation2 + $0xe8] sm:$0xff]
          %v1313 = vld [vmem:[#allocation2 + $0xf0] sm:$0xff]
          %v1314 = vld [vmem:[#allocation2 + $0xf8] sm:$0xff]
          %v1315 = vld [vmem:[#allocation2 + $0x100] sm:$0xff]
          %v1316 = vld [vmem:[#allocation2 + $0x108] sm:$0xff]
          %v1317 = vld [vmem:[#allocation2 + $0x110] sm:$0xff]
          %v1318 = vld [vmem:[#allocation2 + $0x118] sm:$0xff]
          %v1319 = vld [vmem:[#allocation2 + $0x120] sm:$0xff]
          %v1320 = vld [vmem:[#allocation2 + $0x128] sm:$0xff]
          %v1321 = vld [vmem:[#allocation2 + $0x130] sm:$0xff]
          %v1322 = vld [vmem:[#allocation2 + $0x138] sm:$0xff]
          %v1323 = vld [vmem:[#allocation2 + $0x140] sm:$0xff]
          %v1324 = vld [vmem:[#allocation2 + $0x148] sm:$0xff]
          %v1325 = vld [vmem:[#allocation2 + $0x150] sm:$0xff]
          %v1326 = vld [vmem:[#allocation2 + $0x158] sm:$0xff]
          %v1327 = vld [vmem:[#allocation2 + $0x160] sm:$0xff]
          %v1328 = vld [vmem:[#allocation2 + $0x168] sm:$0xff]
          %v1329 = vld [vmem:[#allocation2 + $0x170] sm:$0xff]
          %v1330 = vld [vmem:[#allocation2 + $0x178] sm:$0xff]
          %v1331 = vld [vmem:[#allocation2 + $0x180] sm:$0xff]
          %v1332 = vld [vmem:[#allocation2 + $0x188] sm:$0xff]
          %v1333 = vld [vmem:[#allocation2 + $0x190] sm:$0xff]
          %v1334 = vld [vmem:[#allocation2 + $0x198] sm:$0xff]
          %v1335 = vld [vmem:[#allocation2 + $0x1a0] sm:$0xff]
          %v1336 = vld [vmem:[#allocation2 + $0x1a8] sm:$0xff]
          %v1337 = vld [vmem:[#allocation2 + $0x1b0] sm:$0xff]
          %v1338 = vld [vmem:[#allocation2 + $0x1b8] sm:$0xff]
          %v1339 = vld [vmem:[#allocation2 + $0x1c0] sm:$0xff]
          %v1340 = vld [vmem:[#allocation2 + $0x1c8] sm:$0xff]
          %v1341 = vld [vmem:[#allocation2 + $0x1d0] sm:$0xff]
          %v1342 = vld [vmem:[#allocation2 + $0x1d8] sm:$0xff]
          %v1343 = vld [vmem:[#allocation2 + $0x1e0] sm:$0xff]
          %v1344 = vld [vmem:[#allocation2 + $0x1e8] sm:$0xff]
          %v1345 = vld [vmem:[#allocation2 + $0x1f0] sm:$0xff]
          %v1346 = vld [vmem:[#allocation2 + $0x1f8] sm:$0xff]
          %1347 = vst [vmem:[%s195] sm:$0xff] %v1283
          %1348 = vst [vmem:[%s195 + $0x8] sm:$0xff] %v1284
          %1349 = vst [vmem:[%s195 + $0x10] sm:$0xff] %v1285
          %1350 = vst [vmem:[%s195 + $0x18] sm:$0xff] %v1286
          %1351 = vst [vmem:[%s195 + $0x20] sm:$0xff] %v1287
          %1352 = vst [vmem:[%s195 + $0x28] sm:$0xff] %v1288
          %1353 = vst [vmem:[%s195 + $0x30] sm:$0xff] %v1289
          %1354 = vst [vmem:[%s195 + $0x38] sm:$0xff] %v1290
          %1355 = vst [vmem:[%s195 + $0x40] sm:$0xff] %v1291
          %1356 = vst [vmem:[%s195 + $0x48] sm:$0xff] %v1292
          %1357 = vst [vmem:[%s195 + $0x50] sm:$0xff] %v1293
          %1358 = vst [vmem:[%s195 + $0x58] sm:$0xff] %v1294
          %1359 = vst [vmem:[%s195 + $0x60] sm:$0xff] %v1295
          %1360 = vst [vmem:[%s195 + $0x68] sm:$0xff] %v1296
          %1361 = vst [vmem:[%s195 + $0x70] sm:$0xff] %v1297
          %1362 = vst [vmem:[%s195 + $0x78] sm:$0xff] %v1298
          %1363 = vst [vmem:[%s195 + $0x80] sm:$0xff] %v1299
          %1364 = vst [vmem:[%s195 + $0x88] sm:$0xff] %v1300
          %1365 = vst [vmem:[%s195 + $0x90] sm:$0xff] %v1301
          %1366 = vst [vmem:[%s195 + $0x98] sm:$0xff] %v1302
          %1367 = vst [vmem:[%s195 + $0xa0] sm:$0xff] %v1303
          %1368 = vst [vmem:[%s195 + $0xa8] sm:$0xff] %v1304
          %1369 = vst [vmem:[%s195 + $0xb0] sm:$0xff] %v1305
          %1370 = vst [vmem:[%s195 + $0xb8] sm:$0xff] %v1306
          %1371 = vst [vmem:[%s195 + $0xc0] sm:$0xff] %v1307
          %1372 = vst [vmem:[%s195 + $0xc8] sm:$0xff] %v1308
          %1373 = vst [vmem:[%s195 + $0xd0] sm:$0xff] %v1309
          %1374 = vst [vmem:[%s195 + $0xd8] sm:$0xff] %v1310
          %1375 = vst [vmem:[%s195 + $0xe0] sm:$0xff] %v1311
          %1376 = vst [vmem:[%s195 + $0xe8] sm:$0xff] %v1312
          %1377 = vst [vmem:[%s195 + $0xf0] sm:$0xff] %v1313
          %1378 = vst [vmem:[%s195 + $0xf8] sm:$0xff] %v1314
          %1379 = vst [vmem:[%s195 + $0x100] sm:$0xff] %v1315
          %1380 = vst [vmem:[%s195 + $0x108] sm:$0xff] %v1316
          %1381 = vst [vmem:[%s195 + $0x110] sm:$0xff] %v1317
          %1382 = vst [vmem:[%s195 + $0x118] sm:$0xff] %v1318
          %1383 = vst [vmem:[%s195 + $0x120] sm:$0xff] %v1319
          %1384 = vst [vmem:[%s195 + $0x128] sm:$0xff] %v1320
          %1385 = vst [vmem:[%s195 + $0x130] sm:$0xff] %v1321
          %1386 = vst [vmem:[%s195 + $0x138] sm:$0xff] %v1322
          %1387 = vst [vmem:[%s195 + $0x140] sm:$0xff] %v1323
          %1388 = vst [vmem:[%s195 + $0x148] sm:$0xff] %v1324
          %1389 = vst [vmem:[%s195 + $0x150] sm:$0xff] %v1325
          %1390 = vst [vmem:[%s195 + $0x158] sm:$0xff] %v1326
          %1391 = vst [vmem:[%s195 + $0x160] sm:$0xff] %v1327
          %1392 = vst [vmem:[%s195 + $0x168] sm:$0xff] %v1328
          %1393 = vst [vmem:[%s195 + $0x170] sm:$0xff] %v1329
          %1394 = vst [vmem:[%s195 + $0x178] sm:$0xff] %v1330
          %1395 = vst [vmem:[%s195 + $0x180] sm:$0xff] %v1331
          %1396 = vst [vmem:[%s195 + $0x188] sm:$0xff] %v1332
          %1397 = vst [vmem:[%s195 + $0x190] sm:$0xff] %v1333
          %1398 = vst [vmem:[%s195 + $0x198] sm:$0xff] %v1334
          %1399 = vst [vmem:[%s195 + $0x1a0] sm:$0xff] %v1335
          %1400 = vst [vmem:[%s195 + $0x1a8] sm:$0xff] %v1336
          %1401 = vst [vmem:[%s195 + $0x1b0] sm:$0xff] %v1337
          %1402 = vst [vmem:[%s195 + $0x1b8] sm:$0xff] %v1338
          %1403 = vst [vmem:[%s195 + $0x1c0] sm:$0xff] %v1339
          %1404 = vst [vmem:[%s195 + $0x1c8] sm:$0xff] %v1340
          %1405 = vst [vmem:[%s195 + $0x1d0] sm:$0xff] %v1341
          %1406 = vst [vmem:[%s195 + $0x1d8] sm:$0xff] %v1342
          %1407 = vst [vmem:[%s195 + $0x1e0] sm:$0xff] %v1343
          %1408 = vst [vmem:[%s195 + $0x1e8] sm:$0xff] %v1344
          %1409 = vst [vmem:[%s195 + $0x1f0] sm:$0xff] %v1345
          %1410 = vst [vmem:[%s195 + $0x1f8] sm:$0xff] %v1346
        $region36: #{conv_matmul.1} parent=27 // pred_fallthru
          _
        %s1411 = sand.u32 %s101, 1
        %s1412 = scalar_lea.sflag [#allocation4], %s1411
        %s1413 = sand.u32 %s101, 1
        %s1414 = smul.addr %s1413, 512
        %s1415 = scalar_lea.vmem [#allocation3], %s1414
        // Predicated region
        $region37: #{conv_matmul.1} parent=27 // pred_check
          %p1416 = pneg %p111
        $region38: #{conv_matmul.1} parent=27 // pred_check_branch
          %1418 = sbr.rel (%p1416) target = $region40
        $region39: #{conv_matmul.1} parent=27 // pred_region
          %s1419 = smul.u32 64, %s21
          %s1421 = ssub.s32 8192, 8192
          %1422 = vsyncadd %s1412, %s1421
          %s1423 = sadd.s32 %s22, %s1419
          %s1424 = smul.addr %s1423, 128
          %s1425 = scalar_lea.hbm %s2, %s1424
          %s1426 = sshll.u32 %s1415, 4
          %s1427 = int_to_ptr.vmem [resolvable:$true] %s1426
          %1432 = dma.vmem_to_hbm [thread:$0]  %s1427, 8192, %s1425, %s1412, 128, 128, 8
        $region40: #{conv_matmul.1} parent=27 // pred_fallthru
          _
      $region28: #{conv_matmul.1} parent=5 // pred_fallthru
        _
      %p1433 = scmp.le.s32.totalorder 2, %s11
      // Predicated region
      $region41: #{conv_matmul.1} parent=5 // pred_check
        %p1434 = pneg %p1433
      $region42: #{conv_matmul.1} parent=5 // pred_check_branch
        %1436 = sbr.rel (%p1434) target = $region44
      $region43: #{conv_matmul.1} parent=5 // pred_region
        %s1437 = ssub.s32 %s11, 2
        // Predicated region
        $region45: #{conv_matmul.1} parent=43 // pred_check
          %p1438 = pneg %p117
        $region46: #{conv_matmul.1} parent=43 // pred_check_branch
          %1440 = sbr.rel (%p1438) target = $region48
        $region47: #{conv_matmul.1} parent=43 // pred_region
          %s1441 = sand.u32 %s102, 1
          %s1442 = scalar_lea.sflag [#allocation4], %s1441
          %s1443 = sand.u32 %s102, 1
          %s1444 = smul.addr %s1443, 512
          %s1445 = scalar_lea.vmem [#allocation3], %s1444
          %1446 = dma.done %s1442, 8192
        $region48: #{conv_matmul.1} parent=43 // pred_fallthru
          _
      $region44: #{conv_matmul.1} parent=5 // pred_fallthru
        _
    $region6: #{conv_matmul.1} parent=1 // loop_footer
      %s15 = sadd.s32 1, %s11
    $region7: #{conv_matmul.1} parent=1 // loop_footer_branch
      %10 = sbr.rel target = $region3
    $region8: #{conv_matmul.1} parent=1 // loop_exit
      _
    %1447 = vsyncpa [#allocation4], 1
    %s1448 = scalar_lea.sflag [#allocation4], 1
    %1449 = vsyncpa %s1448, 1

</llo_original>
